<compile_context>
chip_gen: v5e
topology: v5e:2x2
jax: 0.10.0
libtpu: 0.0.40
codegen_flags: <defaults>
</compile_context>

<pallas_src>
import jax
import jax.numpy as jnp
from jax.experimental import pallas as pl
from jax.experimental.pallas import tpu as pltpu

HIDDEN = 768
LANE = 128
SUBLANE = 8
MAX_TM = 1024         # multiple of 256 (v6e/v7x MXU) and 128 (v5e MXU)
MIN_SPLIT_ROWS = 512  # above this force >=2 grid steps (v7x dual TensorCore)


def _cdiv(a, b):
    return -(-a // b)


def _round_up(x, m):
    return ((x + m - 1) // m) * m


def _choose_tile(n_rows):
    """Balanced row tile: never exceeds MAX_TM, splits evenly across grid
    steps, and guarantees >=2 steps when there is enough work for both
    v7x TensorCores."""
    num_tiles = _cdiv(n_rows, MAX_TM)
    if n_rows > MIN_SPLIT_ROWS and num_tiles < 2:
        num_tiles = 2
    return _round_up(_cdiv(n_rows, num_tiles), SUBLANE)


def _intent_augment_kernel(x_ref, w1_ref, b1_ref, w2_ref, b2_ref, o_ref):
    # x_ref:  (TM, 768)  f32 (input dtype)   w1_ref: (768, 768) bf16
    # b1_ref: (1, 768)   f32                 w2_ref: (768, Tp)  bf16
    # b2_ref: (1, Tp)    f32                 o_ref:  (TM, Tp)   input dtype
    # In-kernel cast to bf16 (VPU work hidden under the MXU), f32 accumulation.
    x_bf = x_ref[...].astype(jnp.bfloat16)

    # First Linear(768, 768).
    h = jnp.dot(x_bf, w1_ref[...], preferred_element_type=jnp.float32)
    h = h + b1_ref[...]

    # LeakyReLU(negative_slope=0.2) in f32 on the VPU.
    h = jnp.where(h > 0, h, 0.2 * h)

    # Second Linear(768, Tp).
    y = jnp.dot(h.astype(w2_ref.dtype), w2_ref[...],
                preferred_element_type=jnp.float32)
    y = y + b2_ref[...]

    o_ref[...] = y.astype(o_ref.dtype)


def prepare_params(params):
    """One-time conversion of raw f32 params into the kernel-resident layout:
    bf16 weights, f32 biases, tag dimension zero-padded to a multiple of 128
    lanes. Call once and reuse across inference calls."""
    w1, b1, w2, b2 = params["w1"], params["b1"], params["w2"], params["b2"]
    tag_classes = w2.shape[1]
    t_pad = _round_up(tag_classes, LANE)

    w1_bf = w1.astype(jnp.bfloat16)
    w2_bf = w2.astype(jnp.bfloat16)
    b2_f = b2.astype(jnp.float32)
    if t_pad != tag_classes:
        w2_bf = jnp.pad(w2_bf, ((0, 0), (0, t_pad - tag_classes)))
        b2_f = jnp.pad(b2_f, (0, t_pad - tag_classes))

    return {
        "w1": w1_bf,                                       # (768, 768)  bf16
        "b1": b1.astype(jnp.float32).reshape(1, HIDDEN),   # (1, 768)    f32
        "w2": w2_bf,                                       # (768, Tp)   bf16
        "b2": b2_f.reshape(1, t_pad),                      # (1, Tp)     f32
        "tag_classes": tag_classes,                        # static int
    }


def intent_augment(bert_hidden, att_hidden, prepared):
    """Fused MLP head. `att_hidden` is accepted (and ignored) to match the
    PyTorch forward signature. `prepared` comes from prepare_params()."""
    del att_hidden  # unused, same as the reference module
    w1, b1, w2, b2 = prepared["w1"], prepared["b1"], prepared["w2"], prepared["b2"]
    tag_classes = prepared["tag_classes"]
    t_pad = w2.shape[1]

    orig_shape = bert_hidden.shape
    x = bert_hidden.reshape(-1, orig_shape[-1])   # (N, 768), stays in input dtype
    n_rows = x.shape[0]
    out_dtype = bert_hidden.dtype

    tm = _choose_tile(n_rows)
    grid = (_cdiv(n_rows, tm),)

    x_bytes = x.size * x.dtype.itemsize
    out_bytes = n_rows * t_pad * jnp.dtype(out_dtype).itemsize
    cost = pl.CostEstimate(
        flops=2 * n_rows * HIDDEN * HIDDEN + 2 * n_rows * HIDDEN * t_pad,
        transcendentals=0,
        bytes_accessed=(x_bytes + w1.size * 2 + w2.size * 2
                        + b1.size * 4 + b2.size * 4 + out_bytes),
    )

    out = pl.pallas_call(
        _intent_augment_kernel,
        out_shape=jax.ShapeDtypeStruct((n_rows, t_pad), out_dtype),
        grid_spec=pltpu.PrefetchScalarGridSpec(
            num_scalar_prefetch=0,
            grid=grid,
            in_specs=[
                pl.BlockSpec((tm, HIDDEN), lambda i: (i, 0)),      # x tiles stream
                pl.BlockSpec((HIDDEN, HIDDEN), lambda i: (0, 0)),  # w1 resident
                pl.BlockSpec((1, HIDDEN), lambda i: (0, 0)),       # b1 resident
                pl.BlockSpec((HIDDEN, t_pad), lambda i: (0, 0)),   # w2 resident
                pl.BlockSpec((1, t_pad), lambda i: (0, 0)),        # b2 resident
            ],
            out_specs=pl.BlockSpec((tm, t_pad), lambda i: (i, 0)),
        ),
        compiler_params=pltpu.CompilerParams(
            dimension_semantics=("parallel",),    # v7x 2-TC split; no-op v5e/v6e
            vmem_limit_bytes=32 * 1024 * 1024,    # headroom for TM=1024 on v5e
        ),
        cost_estimate=cost,
    )(x, w1, b1, w2, b2)

    out = out[:, :tag_classes]
    return out.reshape(*orig_shape[:-1], tag_classes)


def init_params(key, tag_classes):
    """Deterministic parameter init (shapes match nn.Linear(768,768) and
    nn.Linear(768, tag_classes)). Weights are stored [in, out]."""
    k1, k2, k3, k4 = jax.random.split(key, 4)
    scale1 = 1.0 / jnp.sqrt(HIDDEN)
    return {
        "w1": jax.random.uniform(k1, (HIDDEN, HIDDEN), jnp.float32,
                                 -scale1, scale1),
        "b1": jax.random.uniform(k2, (HIDDEN,), jnp.float32, -scale1, scale1),
        "w2": jax.random.uniform(k3, (HIDDEN, tag_classes), jnp.float32,
                                 -scale1, scale1),
        "b2": jax.random.uniform(k4, (tag_classes,), jnp.float32,
                                 -scale1, scale1),
    }


def _reference(bert_hidden, params):
    h = bert_hidden @ params["w1"] + params["b1"]
    h = jnp.where(h > 0, h, 0.2 * h)
    return h @ params["w2"] + params["b2"]


if __name__ == "__main__":
    key = jax.random.PRNGKey(0)
    k_param, k_bert, k_att = jax.random.split(key, 3)

    batch, seq, tag_classes = 2, 8, 16
    params = init_params(k_param, tag_classes)
    prepared = prepare_params(params)   # one-time weight cast/pad, off hot path

    bert_hidden = jax.random.normal(k_bert, (batch, seq, HIDDEN), jnp.float32)
    att_hidden = jax.random.normal(k_att, (batch, seq, HIDDEN), jnp.float32)

    out = intent_augment(bert_hidden, att_hidden, prepared)
    out = jax.block_until_ready(out)

    ref = _reference(bert_hidden, params)
    assert out.shape == (batch, seq, tag_classes), out.shape
    # bf16 MXU inputs with f32 accumulation -> relaxed tolerance vs f32 ref.
    assert jnp.allclose(out, ref, atol=2e-2, rtol=2e-2), (
        float(jnp.max(jnp.abs(out - ref))))

    print("KERNEL_OK")
</pallas_src>

<mosaic_0001>
module attributes {stable_mosaic.version = 11 : i64} {
  func.func @_intent_augment_kernel(%arg0: i32, %arg1: memref<16x768xf32, #tpu.memory_space<vmem>>, %arg2: memref<768x768xbf16, #tpu.memory_space<vmem>>, %arg3: memref<1x768xf32, #tpu.memory_space<vmem>>, %arg4: memref<768x128xbf16, #tpu.memory_space<vmem>>, %arg5: memref<1x128xf32, #tpu.memory_space<vmem>>, %arg6: memref<16x128xf32, #tpu.memory_space<vmem>>) attributes {dimension_semantics = [#tpu.dimension_semantics<parallel>], iteration_bounds = array<i64: 1>, scalar_prefetch = 0 : i64, scratch_operands = 0 : i64, tpu.core_type = #tpu.core_type<tc>, window_params = [{transform_indices = @transform_0, window_bounds = array<i64: 16, 768>}, {pipeline_mode = #tpu.pipeline_mode<synchronous>, transform_indices = @transform_1, window_bounds = array<i64: 768, 768>}, {pipeline_mode = #tpu.pipeline_mode<synchronous>, transform_indices = @transform_2, window_bounds = array<i64: 1, 768>}, {pipeline_mode = #tpu.pipeline_mode<synchronous>, transform_indices = @transform_3, window_bounds = array<i64: 768, 128>}, {pipeline_mode = #tpu.pipeline_mode<synchronous>, transform_indices = @transform_4, window_bounds = array<i64: 1, 128>}, {transform_indices = @transform_5, window_bounds = array<i64: 16, 128>}]} {
    %c0 = arith.constant 0 : index
    %c0_0 = arith.constant 0 : index
    %0 = vector.load %arg1[%c0, %c0_0] : memref<16x768xf32, #tpu.memory_space<vmem>>, vector<16x768xf32>
    %1 = arith.truncf %0 : vector<16x768xf32> to vector<16x768xbf16>
    %c0_1 = arith.constant 0 : index
    %c0_2 = arith.constant 0 : index
    %2 = vector.load %arg2[%c0_1, %c0_2] : memref<768x768xbf16, #tpu.memory_space<vmem>>, vector<768x768xbf16>
    %cst = arith.constant dense<0.000000e+00> : vector<16x768xf32>
    %3 = tpu.matmul %1, %2, %cst {dimension_numbers = #tpu.dot_dimension_numbers<[1], [0], [0], [1], [0, 0, 1, 1], [], []>} : vector<16x768xbf16>, vector<768x768xbf16>, vector<16x768xf32> -> vector<16x768xf32>
    %c0_3 = arith.constant 0 : index
    %c0_4 = arith.constant 0 : index
    %4 = vector.load %arg3[%c0_3, %c0_4] : memref<1x768xf32, #tpu.memory_space<vmem>>, vector<1x768xf32>
    %5 = vector.broadcast %4 : vector<1x768xf32> to vector<16x768xf32>
    %6 = arith.addf %3, %5 : vector<16x768xf32>
    %cst_5 = arith.constant 0.000000e+00 : f32
    %7 = vector.broadcast %cst_5 : f32 to vector<16x768xf32>
    %8 = arith.cmpf ogt, %6, %7 : vector<16x768xf32>
    %cst_6 = arith.constant 2.000000e-01 : f32
    %9 = vector.broadcast %cst_6 : f32 to vector<16x768xf32>
    %10 = arith.mulf %9, %6 : vector<16x768xf32>
    %11 = arith.select %8, %6, %10 : vector<16x768xi1>, vector<16x768xf32>
    %12 = arith.truncf %11 : vector<16x768xf32> to vector<16x768xbf16>
    %c0_7 = arith.constant 0 : index
    %c0_8 = arith.constant 0 : index
    %13 = vector.load %arg4[%c0_7, %c0_8] : memref<768x128xbf16, #tpu.memory_space<vmem>>, vector<768x128xbf16>
    %cst_9 = arith.constant dense<0.000000e+00> : vector<16x128xf32>
    %14 = tpu.matmul %12, %13, %cst_9 {dimension_numbers = #tpu.dot_dimension_numbers<[1], [0], [0], [1], [0, 0, 1, 1], [], []>} : vector<16x768xbf16>, vector<768x128xbf16>, vector<16x128xf32> -> vector<16x128xf32>
    %c0_10 = arith.constant 0 : index
    %c0_11 = arith.constant 0 : index
    %15 = vector.load %arg5[%c0_10, %c0_11] : memref<1x128xf32, #tpu.memory_space<vmem>>, vector<1x128xf32>
    %16 = vector.broadcast %15 : vector<1x128xf32> to vector<16x128xf32>
    %17 = arith.addf %14, %16 : vector<16x128xf32>
    %c0_12 = arith.constant 0 : index
    %c0_13 = arith.constant 0 : index
    %18 = vector.load %arg6[%c0_12, %c0_13] : memref<16x128xf32, #tpu.memory_space<vmem>>, vector<16x128xf32>
    tpu.vector_store %arg6[%c0_12, %c0_13], %17 {strides = array<i32>} : memref<16x128xf32, #tpu.memory_space<vmem>>, vector<16x128xf32>,
    return
  }
  func.func @transform_0(%arg0: i32) -> (i32, i32) {
    %c0_i32 = arith.constant 0 : i32
    %c0_i32_0 = arith.constant 0 : i32
    return %arg0, %c0_i32 : i32, i32
  }
  func.func @transform_1(%arg0: i32) -> (i32, i32) {
    %c0_i32 = arith.constant 0 : i32
    %c0_i32_0 = arith.constant 0 : i32
    %c0_i32_1 = arith.constant 0 : i32
    return %c0_i32, %c0_i32_0 : i32, i32
  }
  func.func @transform_2(%arg0: i32) -> (i32, i32) {
    %c0_i32 = arith.constant 0 : i32
    %c0_i32_0 = arith.constant 0 : i32
    %c0_i32_1 = arith.constant 0 : i32
    return %c0_i32, %c0_i32_0 : i32, i32
  }
  func.func @transform_3(%arg0: i32) -> (i32, i32) {
    %c0_i32 = arith.constant 0 : i32
    %c0_i32_0 = arith.constant 0 : i32
    %c0_i32_1 = arith.constant 0 : i32
    return %c0_i32, %c0_i32_0 : i32, i32
  }
  func.func @transform_4(%arg0: i32) -> (i32, i32) {
    %c0_i32 = arith.constant 0 : i32
    %c0_i32_0 = arith.constant 0 : i32
    %c0_i32_1 = arith.constant 0 : i32
    return %c0_i32, %c0_i32_0 : i32, i32
  }
  func.func @transform_5(%arg0: i32) -> (i32, i32) {
    %c0_i32 = arith.constant 0 : i32
    %c0_i32_0 = arith.constant 0 : i32
    return %arg0, %c0_i32 : i32, i32
  }
}

</mosaic_0001>

<llo_original>
// kernel: tpu_custom_call.1
$region0: #{tpu_custom_call.1}
  #allocation0 [shape = 'u32[]', space=smem, size = 0x4, offset = 0x4, fixed_abs, tag = 'smem constant byte address 0x4 - core index']
  #allocation1 [shape = 'u32[72,128]{1,0:T(1,128)}', space=vmem, size = 0x9000, scoped, tag = 'internal scratch']
  %s0 = inlined_call_operand.hbm [shape: f32[16,768], index: 0, kind: input, shape index: {}]
  %s1 = inlined_call_operand.hbm [shape: bf16[768,768], index: 1, kind: input, shape index: {}]
  %s2 = inlined_call_operand.hbm [shape: f32[1,768], index: 2, kind: input, shape index: {}]
  %s3 = inlined_call_operand.hbm [shape: bf16[768,128], index: 3, kind: input, shape index: {}]
  %s4 = inlined_call_operand.hbm [shape: f32[1,128], index: 4, kind: input, shape index: {}]
  %s5 = inlined_call_operand.hbm [shape: f32[16,128], index: 5, kind: output, shape index: {}]
  %s6 = sld [smem:[#allocation0]]
  $region50: #{tpu_custom_call.1} parent=0
    _
  %s8 = ssub.s32 1, %s6
  %s9 = scalar_select 0, %s8, %s6
  $region1: #{tpu_custom_call.1} parent=0
    #allocation2 [shape = 'u8[49152]{0}', space=vmem, size = 0xc000, scoped, tag = 'input window, operand 0, single buffered']
    #allocation3 [shape = 's32[1]{0}', space=sflag, size = 0x4, scoped, tag = 'scoped memory for tpu_custom_call.1']
    #allocation4 [shape = 's32[1]{0}', space=sflag, size = 0x4, scoped, tag = 'scoped memory for tpu_custom_call.1']
    #allocation5 [shape = 'u8[1179648]{0}', space=vmem, size = 0x120000, scoped, tag = 'input window, operand 1, single buffered']
    #allocation6 [shape = 's32[1]{0}', space=sflag, size = 0x4, scoped, tag = 'scoped memory for tpu_custom_call.1']
    #allocation7 [shape = 'u8[3072]{0}', space=vmem, size = 0xc00, scoped, tag = 'input window, operand 2, single buffered']
    #allocation8 [shape = 'u8[196608]{0}', space=vmem, size = 0x30000, scoped, tag = 'input window, operand 3, single buffered']
    #allocation9 [shape = 's32[1]{0}', space=sflag, size = 0x4, scoped, tag = 'scoped memory for tpu_custom_call.1']
    #allocation10 [shape = 'u8[512]{0}', space=vmem, size = 0x400, scoped, tag = 'input window, operand 4, single buffered']
    #allocation11 [shape = 'u8[8192]{0}', space=vmem, size = 0x2000, scoped, tag = 'output window, operand 0, single buffered']
    %10 = vsyncpa [#allocation3], 0
    %11 = vsyncpa [#allocation6], 0
    %12 = vsyncpa [#allocation9], 0
    %13 = vsyncpa [#allocation4], 0
    // Predicated region
    $region2: #{tpu_custom_call.1} parent=1 // pred_check
      _
    $region3: #{tpu_custom_call.1} parent=1 // pred_check_branch
      %15 = sbr.rel (0) target = $region5
    $region4: #{tpu_custom_call.1} parent=1 // pred_region
      %17 = vsyncadd [#allocation3], 0
      %s18 = sshll.u32 %s0, 4
      %s19 = int_to_ptr.hbm [resolvable:$true] %s18
      %s20 = sshll.u32 [#allocation2], 4
      %s21 = int_to_ptr.vmem [resolvable:$true] %s20
      %26 = dma.hbm_to_vmem [thread:$0]  %s19, 1536, %s21, [#allocation3], 768, 768, 48
    $region5: #{tpu_custom_call.1} parent=1 // pred_fallthru
      _
    // Predicated region
    $region6: #{tpu_custom_call.1} parent=1 // pred_check
      _
    $region7: #{tpu_custom_call.1} parent=1 // pred_check_branch
      %28 = sbr.rel (0) target = $region9
    $region8: #{tpu_custom_call.1} parent=1 // pred_region
      %30 = vsyncadd [#allocation6], 0
      %s31 = sshll.u32 %s1, 4
      %s32 = int_to_ptr.hbm [resolvable:$true] %s31
      %s33 = sshll.u32 [#allocation5], 4
      %s34 = int_to_ptr.vmem [resolvable:$true] %s33
      %39 = dma.hbm_to_vmem [thread:$0]  %s32, 36864, %s34, [#allocation6], 384, 384, 24
    $region9: #{tpu_custom_call.1} parent=1 // pred_fallthru
      _
    // Predicated region
    $region10: #{tpu_custom_call.1} parent=1 // pred_check
      _
    $region11: #{tpu_custom_call.1} parent=1 // pred_check_branch
      %41 = sbr.rel (0) target = $region13
    $region12: #{tpu_custom_call.1} parent=1 // pred_region
      %43 = vsyncadd [#allocation6], 0
      %s45 = sshll.u32 %s2, 4
      %s46 = int_to_ptr.hbm [resolvable:$true] %s45
      %s47 = sshll.u32 [#allocation7], 4
      %s48 = int_to_ptr.vmem [resolvable:$true] %s47
      %50 = dma.hbm_to_vmem [thread:$0]  %s46, 96, %s48, [#allocation6]
    $region13: #{tpu_custom_call.1} parent=1 // pred_fallthru
      _
    // Predicated region
    $region14: #{tpu_custom_call.1} parent=1 // pred_check
      _
    $region15: #{tpu_custom_call.1} parent=1 // pred_check_branch
      %52 = sbr.rel (0) target = $region17
    $region16: #{tpu_custom_call.1} parent=1 // pred_region
      %54 = vsyncadd [#allocation9], 0
      %s55 = sshll.u32 %s3, 4
      %s56 = int_to_ptr.hbm [resolvable:$true] %s55
      %s57 = sshll.u32 [#allocation8], 4
      %s58 = int_to_ptr.vmem [resolvable:$true] %s57
      %63 = dma.hbm_to_vmem [thread:$0]  %s56, 6144, %s58, [#allocation9], 64, 64, 4
    $region17: #{tpu_custom_call.1} parent=1 // pred_fallthru
      _
    // Predicated region
    $region18: #{tpu_custom_call.1} parent=1 // pred_check
      _
    $region19: #{tpu_custom_call.1} parent=1 // pred_check_branch
      %65 = sbr.rel (0) target = $region21
    $region20: #{tpu_custom_call.1} parent=1 // pred_region
      %67 = vsyncadd [#allocation9], 0
      %s69 = sshll.u32 %s4, 4
      %s70 = int_to_ptr.hbm [resolvable:$true] %s69
      %s71 = sshll.u32 [#allocation10], 4
      %s72 = int_to_ptr.vmem [resolvable:$true] %s71
      %74 = dma.hbm_to_vmem [thread:$0]  %s70, 16, %s72, [#allocation9]
    $region21: #{tpu_custom_call.1} parent=1 // pred_fallthru
      _
    // Predicated region
    $region22: #{tpu_custom_call.1} parent=1 // pred_check
      _
    $region23: #{tpu_custom_call.1} parent=1 // pred_check_branch
      %76 = sbr.rel (0) target = $region25
    $region24: #{tpu_custom_call.1} parent=1 // pred_region
      %78 = dma.done [#allocation3], 1536
    $region25: #{tpu_custom_call.1} parent=1 // pred_fallthru
      _
    // Predicated region
    $region26: #{tpu_custom_call.1} parent=1 // pred_check
      _
    $region27: #{tpu_custom_call.1} parent=1 // pred_check_branch
      %80 = sbr.rel (0) target = $region29
    $region28: #{tpu_custom_call.1} parent=1 // pred_region
      %82 = dma.done [#allocation6], 36864
    $region29: #{tpu_custom_call.1} parent=1 // pred_fallthru
      _
    // Predicated region
    $region30: #{tpu_custom_call.1} parent=1 // pred_check
      _
    $region31: #{tpu_custom_call.1} parent=1 // pred_check_branch
      %84 = sbr.rel (0) target = $region33
    $region32: #{tpu_custom_call.1} parent=1 // pred_region
      %86 = dma.done [#allocation6], 96
    $region33: #{tpu_custom_call.1} parent=1 // pred_fallthru
      _
    // Predicated region
    $region34: #{tpu_custom_call.1} parent=1 // pred_check
      _
    $region35: #{tpu_custom_call.1} parent=1 // pred_check_branch
      %88 = sbr.rel (0) target = $region37
    $region36: #{tpu_custom_call.1} parent=1 // pred_region
      %90 = dma.done [#allocation9], 6144
    $region37: #{tpu_custom_call.1} parent=1 // pred_fallthru
      _
    // Predicated region
    $region38: #{tpu_custom_call.1} parent=1 // pred_check
      _
    $region39: #{tpu_custom_call.1} parent=1 // pred_check_branch
      %92 = sbr.rel (0) target = $region41
    $region40: #{tpu_custom_call.1} parent=1 // pred_region
      %94 = dma.done [#allocation9], 16
    $region41: #{tpu_custom_call.1} parent=1 // pred_fallthru
      _
    %v95 = vld [vmem:[#allocation2] sm:$0xff]
    %v96 = vld [vmem:[#allocation2 + $0x8] sm:$0xff]
    %v97 = vld [vmem:[#allocation2 + $0x10] sm:$0xff]
    %v98 = vld [vmem:[#allocation2 + $0x18] sm:$0xff]
    %v99 = vld [vmem:[#allocation2 + $0x20] sm:$0xff]
    %v100 = vld [vmem:[#allocation2 + $0x28] sm:$0xff]
    %v101 = vld [vmem:[#allocation2 + $0x30] sm:$0xff]
    %v102 = vld [vmem:[#allocation2 + $0x38] sm:$0xff]
    %v103 = vld [vmem:[#allocation2 + $0x40] sm:$0xff]
    %v104 = vld [vmem:[#allocation2 + $0x48] sm:$0xff]
    %v105 = vld [vmem:[#allocation2 + $0x50] sm:$0xff]
    %v106 = vld [vmem:[#allocation2 + $0x58] sm:$0xff]
    %v107 = vpack.c.bf16 %v101, %v95
    %v108 = vpack.c.bf16 %v102, %v96
    %v109 = vpack.c.bf16 %v103, %v97
    %v110 = vpack.c.bf16 %v104, %v98
    %v111 = vpack.c.bf16 %v105, %v99
    %v112 = vpack.c.bf16 %v106, %v100
    %v113 = vld [vmem:[#allocation5] sm:$0xff]
    %v114 = vld [vmem:[#allocation5 + $0x8] sm:$0xff]
    %v115 = vld [vmem:[#allocation5 + $0x10] sm:$0xff]
    %v116 = vld [vmem:[#allocation5 + $0x18] sm:$0xff]
    %v117 = vld [vmem:[#allocation5 + $0x20] sm:$0xff]
    %v118 = vld [vmem:[#allocation5 + $0x28] sm:$0xff]
    %v119 = vld [vmem:[#allocation5 + $0x30] sm:$0xff]
    %v120 = vld [vmem:[#allocation5 + $0x38] sm:$0xff]
    %v121 = vld [vmem:[#allocation5 + $0x40] sm:$0xff]
    %v122 = vld [vmem:[#allocation5 + $0x48] sm:$0xff]
    %v123 = vld [vmem:[#allocation5 + $0x50] sm:$0xff]
    %v124 = vld [vmem:[#allocation5 + $0x58] sm:$0xff]
    %v125 = vld [vmem:[#allocation5 + $0x60] sm:$0xff]
    %v126 = vld [vmem:[#allocation5 + $0x68] sm:$0xff]
    %v127 = vld [vmem:[#allocation5 + $0x70] sm:$0xff]
    %v128 = vld [vmem:[#allocation5 + $0x78] sm:$0xff]
    %v129 = vld [vmem:[#allocation5 + $0x80] sm:$0xff]
    %v130 = vld [vmem:[#allocation5 + $0x88] sm:$0xff]
    %v131 = vld [vmem:[#allocation5 + $0x90] sm:$0xff]
    %v132 = vld [vmem:[#allocation5 + $0x98] sm:$0xff]
    %v133 = vld [vmem:[#allocation5 + $0xa0] sm:$0xff]
    %v134 = vld [vmem:[#allocation5 + $0xa8] sm:$0xff]
    %v135 = vld [vmem:[#allocation5 + $0xb0] sm:$0xff]
    %v136 = vld [vmem:[#allocation5 + $0xb8] sm:$0xff]
    %v137 = vld [vmem:[#allocation5 + $0xc0] sm:$0xff]
    %v138 = vld [vmem:[#allocation5 + $0xc8] sm:$0xff]
    %v139 = vld [vmem:[#allocation5 + $0xd0] sm:$0xff]
    %v140 = vld [vmem:[#allocation5 + $0xd8] sm:$0xff]
    %v141 = vld [vmem:[#allocation5 + $0xe0] sm:$0xff]
    %v142 = vld [vmem:[#allocation5 + $0xe8] sm:$0xff]
    %v143 = vld [vmem:[#allocation5 + $0xf0] sm:$0xff]
    %v144 = vld [vmem:[#allocation5 + $0xf8] sm:$0xff]
    %v145 = vld [vmem:[#allocation5 + $0x100] sm:$0xff]
    %v146 = vld [vmem:[#allocation5 + $0x108] sm:$0xff]
    %v147 = vld [vmem:[#allocation5 + $0x110] sm:$0xff]
    %v148 = vld [vmem:[#allocation5 + $0x118] sm:$0xff]
    %v149 = vld [vmem:[#allocation5 + $0x120] sm:$0xff]
    %v150 = vld [vmem:[#allocation5 + $0x128] sm:$0xff]
    %v151 = vld [vmem:[#allocation5 + $0x130] sm:$0xff]
    %v152 = vld [vmem:[#allocation5 + $0x138] sm:$0xff]
    %v153 = vld [vmem:[#allocation5 + $0x140] sm:$0xff]
    %v154 = vld [vmem:[#allocation5 + $0x148] sm:$0xff]
    %v155 = vld [vmem:[#allocation5 + $0x150] sm:$0xff]
    %v156 = vld [vmem:[#allocation5 + $0x158] sm:$0xff]
    %v157 = vld [vmem:[#allocation5 + $0x160] sm:$0xff]
    %v158 = vld [vmem:[#allocation5 + $0x168] sm:$0xff]
    %v159 = vld [vmem:[#allocation5 + $0x170] sm:$0xff]
    %v160 = vld [vmem:[#allocation5 + $0x178] sm:$0xff]
    %v161 = vld [vmem:[#allocation5 + $0x180] sm:$0xff]
    %v162 = vld [vmem:[#allocation5 + $0x188] sm:$0xff]
    %v163 = vld [vmem:[#allocation5 + $0x190] sm:$0xff]
    %v164 = vld [vmem:[#allocation5 + $0x198] sm:$0xff]
    %v165 = vld [vmem:[#allocation5 + $0x1a0] sm:$0xff]
    %v166 = vld [vmem:[#allocation5 + $0x1a8] sm:$0xff]
    %v167 = vld [vmem:[#allocation5 + $0x1b0] sm:$0xff]
    %v168 = vld [vmem:[#allocation5 + $0x1b8] sm:$0xff]
    %v169 = vld [vmem:[#allocation5 + $0x1c0] sm:$0xff]
    %v170 = vld [vmem:[#allocation5 + $0x1c8] sm:$0xff]
    %v171 = vld [vmem:[#allocation5 + $0x1d0] sm:$0xff]
    %v172 = vld [vmem:[#allocation5 + $0x1d8] sm:$0xff]
    %v173 = vld [vmem:[#allocation5 + $0x1e0] sm:$0xff]
    %v174 = vld [vmem:[#allocation5 + $0x1e8] sm:$0xff]
    %v175 = vld [vmem:[#allocation5 + $0x1f0] sm:$0xff]
    %v176 = vld [vmem:[#allocation5 + $0x1f8] sm:$0xff]
    %v177 = vld [vmem:[#allocation5 + $0x200] sm:$0xff]
    %v178 = vld [vmem:[#allocation5 + $0x208] sm:$0xff]
    %v179 = vld [vmem:[#allocation5 + $0x210] sm:$0xff]
    %v180 = vld [vmem:[#allocation5 + $0x218] sm:$0xff]
    %v181 = vld [vmem:[#allocation5 + $0x220] sm:$0xff]
    %v182 = vld [vmem:[#allocation5 + $0x228] sm:$0xff]
    %v183 = vld [vmem:[#allocation5 + $0x230] sm:$0xff]
    %v184 = vld [vmem:[#allocation5 + $0x238] sm:$0xff]
    %v185 = vld [vmem:[#allocation5 + $0x240] sm:$0xff]
    %v186 = vld [vmem:[#allocation5 + $0x248] sm:$0xff]
    %v187 = vld [vmem:[#allocation5 + $0x250] sm:$0xff]
    %v188 = vld [vmem:[#allocation5 + $0x258] sm:$0xff]
    %v189 = vld [vmem:[#allocation5 + $0x260] sm:$0xff]
    %v190 = vld [vmem:[#allocation5 + $0x268] sm:$0xff]
    %v191 = vld [vmem:[#allocation5 + $0x270] sm:$0xff]
    %v192 = vld [vmem:[#allocation5 + $0x278] sm:$0xff]
    %v193 = vld [vmem:[#allocation5 + $0x280] sm:$0xff]
    %v194 = vld [vmem:[#allocation5 + $0x288] sm:$0xff]
    %v195 = vld [vmem:[#allocation5 + $0x290] sm:$0xff]
    %v196 = vld [vmem:[#allocation5 + $0x298] sm:$0xff]
    %v197 = vld [vmem:[#allocation5 + $0x2a0] sm:$0xff]
    %v198 = vld [vmem:[#allocation5 + $0x2a8] sm:$0xff]
    %v199 = vld [vmem:[#allocation5 + $0x2b0] sm:$0xff]
    %v200 = vld [vmem:[#allocation5 + $0x2b8] sm:$0xff]
    %v201 = vld [vmem:[#allocation5 + $0x2c0] sm:$0xff]
    %v202 = vld [vmem:[#allocation5 + $0x2c8] sm:$0xff]
    %v203 = vld [vmem:[#allocation5 + $0x2d0] sm:$0xff]
    %v204 = vld [vmem:[#allocation5 + $0x2d8] sm:$0xff]
    %v205 = vld [vmem:[#allocation5 + $0x2e0] sm:$0xff]
    %v206 = vld [vmem:[#allocation5 + $0x2e8] sm:$0xff]
    %v207 = vld [vmem:[#allocation5 + $0x2f0] sm:$0xff]
    %v208 = vld [vmem:[#allocation5 + $0x2f8] sm:$0xff]
    %v209 = vld [vmem:[#allocation5 + $0x300] sm:$0xff]
    %v210 = vld [vmem:[#allocation5 + $0x308] sm:$0xff]
    %v211 = vld [vmem:[#allocation5 + $0x310] sm:$0xff]
    %v212 = vld [vmem:[#allocation5 + $0x318] sm:$0xff]
    %v213 = vld [vmem:[#allocation5 + $0x320] sm:$0xff]
    %v214 = vld [vmem:[#allocation5 + $0x328] sm:$0xff]
    %v215 = vld [vmem:[#allocation5 + $0x330] sm:$0xff]
    %v216 = vld [vmem:[#allocation5 + $0x338] sm:$0xff]
    %v217 = vld [vmem:[#allocation5 + $0x340] sm:$0xff]
    %v218 = vld [vmem:[#allocation5 + $0x348] sm:$0xff]
    %v219 = vld [vmem:[#allocation5 + $0x350] sm:$0xff]
    %v220 = vld [vmem:[#allocation5 + $0x358] sm:$0xff]
    %v221 = vld [vmem:[#allocation5 + $0x360] sm:$0xff]
    %v222 = vld [vmem:[#allocation5 + $0x368] sm:$0xff]
    %v223 = vld [vmem:[#allocation5 + $0x370] sm:$0xff]
    %v224 = vld [vmem:[#allocation5 + $0x378] sm:$0xff]
    %v225 = vld [vmem:[#allocation5 + $0x380] sm:$0xff]
    %v226 = vld [vmem:[#allocation5 + $0x388] sm:$0xff]
    %v227 = vld [vmem:[#allocation5 + $0x390] sm:$0xff]
    %v228 = vld [vmem:[#allocation5 + $0x398] sm:$0xff]
    %v229 = vld [vmem:[#allocation5 + $0x3a0] sm:$0xff]
    %v230 = vld [vmem:[#allocation5 + $0x3a8] sm:$0xff]
    %v231 = vld [vmem:[#allocation5 + $0x3b0] sm:$0xff]
    %v232 = vld [vmem:[#allocation5 + $0x3b8] sm:$0xff]
    %v233 = vld [vmem:[#allocation5 + $0x3c0] sm:$0xff]
    %v234 = vld [vmem:[#allocation5 + $0x3c8] sm:$0xff]
    %v235 = vld [vmem:[#allocation5 + $0x3d0] sm:$0xff]
    %v236 = vld [vmem:[#allocation5 + $0x3d8] sm:$0xff]
    %v237 = vld [vmem:[#allocation5 + $0x3e0] sm:$0xff]
    %v238 = vld [vmem:[#allocation5 + $0x3e8] sm:$0xff]
    %v239 = vld [vmem:[#allocation5 + $0x3f0] sm:$0xff]
    %v240 = vld [vmem:[#allocation5 + $0x3f8] sm:$0xff]
    %v241 = vld [vmem:[#allocation5 + $0x400] sm:$0xff]
    %v242 = vld [vmem:[#allocation5 + $0x408] sm:$0xff]
    %v243 = vld [vmem:[#allocation5 + $0x410] sm:$0xff]
    %v244 = vld [vmem:[#allocation5 + $0x418] sm:$0xff]
    %v245 = vld [vmem:[#allocation5 + $0x420] sm:$0xff]
    %v246 = vld [vmem:[#allocation5 + $0x428] sm:$0xff]
    %v247 = vld [vmem:[#allocation5 + $0x430] sm:$0xff]
    %v248 = vld [vmem:[#allocation5 + $0x438] sm:$0xff]
    %v249 = vld [vmem:[#allocation5 + $0x440] sm:$0xff]
    %v250 = vld [vmem:[#allocation5 + $0x448] sm:$0xff]
    %v251 = vld [vmem:[#allocation5 + $0x450] sm:$0xff]
    %v252 = vld [vmem:[#allocation5 + $0x458] sm:$0xff]
    %v253 = vld [vmem:[#allocation5 + $0x460] sm:$0xff]
    %v254 = vld [vmem:[#allocation5 + $0x468] sm:$0xff]
    %v255 = vld [vmem:[#allocation5 + $0x470] sm:$0xff]
    %v256 = vld [vmem:[#allocation5 + $0x478] sm:$0xff]
    %v257 = vld [vmem:[#allocation5 + $0x480] sm:$0xff]
    %v258 = vld [vmem:[#allocation5 + $0x488] sm:$0xff]
    %v259 = vld [vmem:[#allocation5 + $0x490] sm:$0xff]
    %v260 = vld [vmem:[#allocation5 + $0x498] sm:$0xff]
    %v261 = vld [vmem:[#allocation5 + $0x4a0] sm:$0xff]
    %v262 = vld [vmem:[#allocation5 + $0x4a8] sm:$0xff]
    %v263 = vld [vmem:[#allocation5 + $0x4b0] sm:$0xff]
    %v264 = vld [vmem:[#allocation5 + $0x4b8] sm:$0xff]
    %v265 = vld [vmem:[#allocation5 + $0x4c0] sm:$0xff]
    %v266 = vld [vmem:[#allocation5 + $0x4c8] sm:$0xff]
    %v267 = vld [vmem:[#allocation5 + $0x4d0] sm:$0xff]
    %v268 = vld [vmem:[#allocation5 + $0x4d8] sm:$0xff]
    %v269 = vld [vmem:[#allocation5 + $0x4e0] sm:$0xff]
    %v270 = vld [vmem:[#allocation5 + $0x4e8] sm:$0xff]
    %v271 = vld [vmem:[#allocation5 + $0x4f0] sm:$0xff]
    %v272 = vld [vmem:[#allocation5 + $0x4f8] sm:$0xff]
    %v273 = vld [vmem:[#allocation5 + $0x500] sm:$0xff]
    %v274 = vld [vmem:[#allocation5 + $0x508] sm:$0xff]
    %v275 = vld [vmem:[#allocation5 + $0x510] sm:$0xff]
    %v276 = vld [vmem:[#allocation5 + $0x518] sm:$0xff]
    %v277 = vld [vmem:[#allocation5 + $0x520] sm:$0xff]
    %v278 = vld [vmem:[#allocation5 + $0x528] sm:$0xff]
    %v279 = vld [vmem:[#allocation5 + $0x530] sm:$0xff]
    %v280 = vld [vmem:[#allocation5 + $0x538] sm:$0xff]
    %v281 = vld [vmem:[#allocation5 + $0x540] sm:$0xff]
    %v282 = vld [vmem:[#allocation5 + $0x548] sm:$0xff]
    %v283 = vld [vmem:[#allocation5 + $0x550] sm:$0xff]
    %v284 = vld [vmem:[#allocation5 + $0x558] sm:$0xff]
    %v285 = vld [vmem:[#allocation5 + $0x560] sm:$0xff]
    %v286 = vld [vmem:[#allocation5 + $0x568] sm:$0xff]
    %v287 = vld [vmem:[#allocation5 + $0x570] sm:$0xff]
    %v288 = vld [vmem:[#allocation5 + $0x578] sm:$0xff]
    %v289 = vld [vmem:[#allocation5 + $0x580] sm:$0xff]
    %v290 = vld [vmem:[#allocation5 + $0x588] sm:$0xff]
    %v291 = vld [vmem:[#allocation5 + $0x590] sm:$0xff]
    %v292 = vld [vmem:[#allocation5 + $0x598] sm:$0xff]
    %v293 = vld [vmem:[#allocation5 + $0x5a0] sm:$0xff]
    %v294 = vld [vmem:[#allocation5 + $0x5a8] sm:$0xff]
    %v295 = vld [vmem:[#allocation5 + $0x5b0] sm:$0xff]
    %v296 = vld [vmem:[#allocation5 + $0x5b8] sm:$0xff]
    %v297 = vld [vmem:[#allocation5 + $0x5c0] sm:$0xff]
    %v298 = vld [vmem:[#allocation5 + $0x5c8] sm:$0xff]
    %v299 = vld [vmem:[#allocation5 + $0x5d0] sm:$0xff]
    %v300 = vld [vmem:[#allocation5 + $0x5d8] sm:$0xff]
    %v301 = vld [vmem:[#allocation5 + $0x5e0] sm:$0xff]
    %v302 = vld [vmem:[#allocation5 + $0x5e8] sm:$0xff]
    %v303 = vld [vmem:[#allocation5 + $0x5f0] sm:$0xff]
    %v304 = vld [vmem:[#allocation5 + $0x5f8] sm:$0xff]
    %v305 = vld [vmem:[#allocation5 + $0x600] sm:$0xff]
    %v306 = vld [vmem:[#allocation5 + $0x608] sm:$0xff]
    %v307 = vld [vmem:[#allocation5 + $0x610] sm:$0xff]
    %v308 = vld [vmem:[#allocation5 + $0x618] sm:$0xff]
    %v309 = vld [vmem:[#allocation5 + $0x620] sm:$0xff]
    %v310 = vld [vmem:[#allocation5 + $0x628] sm:$0xff]
    %v311 = vld [vmem:[#allocation5 + $0x630] sm:$0xff]
    %v312 = vld [vmem:[#allocation5 + $0x638] sm:$0xff]
    %v313 = vld [vmem:[#allocation5 + $0x640] sm:$0xff]
    %v314 = vld [vmem:[#allocation5 + $0x648] sm:$0xff]
    %v315 = vld [vmem:[#allocation5 + $0x650] sm:$0xff]
    %v316 = vld [vmem:[#allocation5 + $0x658] sm:$0xff]
    %v317 = vld [vmem:[#allocation5 + $0x660] sm:$0xff]
    %v318 = vld [vmem:[#allocation5 + $0x668] sm:$0xff]
    %v319 = vld [vmem:[#allocation5 + $0x670] sm:$0xff]
    %v320 = vld [vmem:[#allocation5 + $0x678] sm:$0xff]
    %v321 = vld [vmem:[#allocation5 + $0x680] sm:$0xff]
    %v322 = vld [vmem:[#allocation5 + $0x688] sm:$0xff]
    %v323 = vld [vmem:[#allocation5 + $0x690] sm:$0xff]
    %v324 = vld [vmem:[#allocation5 + $0x698] sm:$0xff]
    %v325 = vld [vmem:[#allocation5 + $0x6a0] sm:$0xff]
    %v326 = vld [vmem:[#allocation5 + $0x6a8] sm:$0xff]
    %v327 = vld [vmem:[#allocation5 + $0x6b0] sm:$0xff]
    %v328 = vld [vmem:[#allocation5 + $0x6b8] sm:$0xff]
    %v329 = vld [vmem:[#allocation5 + $0x6c0] sm:$0xff]
    %v330 = vld [vmem:[#allocation5 + $0x6c8] sm:$0xff]
    %v331 = vld [vmem:[#allocation5 + $0x6d0] sm:$0xff]
    %v332 = vld [vmem:[#allocation5 + $0x6d8] sm:$0xff]
    %v333 = vld [vmem:[#allocation5 + $0x6e0] sm:$0xff]
    %v334 = vld [vmem:[#allocation5 + $0x6e8] sm:$0xff]
    %v335 = vld [vmem:[#allocation5 + $0x6f0] sm:$0xff]
    %v336 = vld [vmem:[#allocation5 + $0x6f8] sm:$0xff]
    %v337 = vld [vmem:[#allocation5 + $0x700] sm:$0xff]
    %v338 = vld [vmem:[#allocation5 + $0x708] sm:$0xff]
    %v339 = vld [vmem:[#allocation5 + $0x710] sm:$0xff]
    %v340 = vld [vmem:[#allocation5 + $0x718] sm:$0xff]
    %v341 = vld [vmem:[#allocation5 + $0x720] sm:$0xff]
    %v342 = vld [vmem:[#allocation5 + $0x728] sm:$0xff]
    %v343 = vld [vmem:[#allocation5 + $0x730] sm:$0xff]
    %v344 = vld [vmem:[#allocation5 + $0x738] sm:$0xff]
    %v345 = vld [vmem:[#allocation5 + $0x740] sm:$0xff]
    %v346 = vld [vmem:[#allocation5 + $0x748] sm:$0xff]
    %v347 = vld [vmem:[#allocation5 + $0x750] sm:$0xff]
    %v348 = vld [vmem:[#allocation5 + $0x758] sm:$0xff]
    %v349 = vld [vmem:[#allocation5 + $0x760] sm:$0xff]
    %v350 = vld [vmem:[#allocation5 + $0x768] sm:$0xff]
    %v351 = vld [vmem:[#allocation5 + $0x770] sm:$0xff]
    %v352 = vld [vmem:[#allocation5 + $0x778] sm:$0xff]
    %v353 = vld [vmem:[#allocation5 + $0x780] sm:$0xff]
    %v354 = vld [vmem:[#allocation5 + $0x788] sm:$0xff]
    %v355 = vld [vmem:[#allocation5 + $0x790] sm:$0xff]
    %v356 = vld [vmem:[#allocation5 + $0x798] sm:$0xff]
    %v357 = vld [vmem:[#allocation5 + $0x7a0] sm:$0xff]
    %v358 = vld [vmem:[#allocation5 + $0x7a8] sm:$0xff]
    %v359 = vld [vmem:[#allocation5 + $0x7b0] sm:$0xff]
    %v360 = vld [vmem:[#allocation5 + $0x7b8] sm:$0xff]
    %v361 = vld [vmem:[#allocation5 + $0x7c0] sm:$0xff]
    %v362 = vld [vmem:[#allocation5 + $0x7c8] sm:$0xff]
    %v363 = vld [vmem:[#allocation5 + $0x7d0] sm:$0xff]
    %v364 = vld [vmem:[#allocation5 + $0x7d8] sm:$0xff]
    %v365 = vld [vmem:[#allocation5 + $0x7e0] sm:$0xff]
    %v366 = vld [vmem:[#allocation5 + $0x7e8] sm:$0xff]
    %v367 = vld [vmem:[#allocation5 + $0x7f0] sm:$0xff]
    %v368 = vld [vmem:[#allocation5 + $0x7f8] sm:$0xff]
    %v369 = vld [vmem:[#allocation5 + $0x800] sm:$0xff]
    %v370 = vld [vmem:[#allocation5 + $0x808] sm:$0xff]
    %v371 = vld [vmem:[#allocation5 + $0x810] sm:$0xff]
    %v372 = vld [vmem:[#allocation5 + $0x818] sm:$0xff]
    %v373 = vld [vmem:[#allocation5 + $0x820] sm:$0xff]
    %v374 = vld [vmem:[#allocation5 + $0x828] sm:$0xff]
    %v375 = vld [vmem:[#allocation5 + $0x830] sm:$0xff]
    %v376 = vld [vmem:[#allocation5 + $0x838] sm:$0xff]
    %v377 = vld [vmem:[#allocation5 + $0x840] sm:$0xff]
    %v378 = vld [vmem:[#allocation5 + $0x848] sm:$0xff]
    %v379 = vld [vmem:[#allocation5 + $0x850] sm:$0xff]
    %v380 = vld [vmem:[#allocation5 + $0x858] sm:$0xff]
    %v381 = vld [vmem:[#allocation5 + $0x860] sm:$0xff]
    %v382 = vld [vmem:[#allocation5 + $0x868] sm:$0xff]
    %v383 = vld [vmem:[#allocation5 + $0x870] sm:$0xff]
    %v384 = vld [vmem:[#allocation5 + $0x878] sm:$0xff]
    %v385 = vld [vmem:[#allocation5 + $0x880] sm:$0xff]
    %v386 = vld [vmem:[#allocation5 + $0x888] sm:$0xff]
    %v387 = vld [vmem:[#allocation5 + $0x890] sm:$0xff]
    %v388 = vld [vmem:[#allocation5 + $0x898] sm:$0xff]
    %v389 = vld [vmem:[#allocation5 + $0x8a0] sm:$0xff]
    %v390 = vld [vmem:[#allocation5 + $0x8a8] sm:$0xff]
    %v391 = vld [vmem:[#allocation5 + $0x8b0] sm:$0xff]
    %v392 = vld [vmem:[#allocation5 + $0x8b8] sm:$0xff]
    %v393 = vld [vmem:[#allocation5 + $0x8c0] sm:$0xff]
    %v394 = vld [vmem:[#allocation5 + $0x8c8] sm:$0xff]
    %v395 = vld [vmem:[#allocation5 + $0x8d0] sm:$0xff]
    %v396 = vld [vmem:[#allocation5 + $0x8d8] sm:$0xff]
    %v397 = vld [vmem:[#allocation5 + $0x8e0] sm:$0xff]
    %v398 = vld [vmem:[#allocation5 + $0x8e8] sm:$0xff]
    %v399 = vld [vmem:[#allocation5 + $0x8f0] sm:$0xff]
    %v400 = vld [vmem:[#allocation5 + $0x8f8] sm:$0xff]
    %v401 = vld [vmem:[#allocation7] sm:$0x3f]
    %v403 = vperm.slane %v401, 0
    %v404 = vperm.slane %v401, 1
    %v405 = vperm.slane %v401, 2
    %v406 = vperm.slane %v401, 3
    %v407 = vperm.slane %v401, 4
    %v408 = vperm.slane %v401, 5
    %v703 = vunpack.c.l.b16 %v113
    %v704 = vunpack.c.h.b16 %v113
    %v705 = vunpack.c.l.b16 %v114
    %v706 = vunpack.c.h.b16 %v114
    %v707 = vunpack.c.l.b16 %v115
    %v708 = vunpack.c.h.b16 %v115
    %v709 = vunpack.c.l.b16 %v116
    %v710 = vunpack.c.h.b16 %v116
    %v711 = vunpack.c.l.b16 %v117
    %v712 = vunpack.c.h.b16 %v117
    %v713 = vunpack.c.l.b16 %v118
    %v714 = vunpack.c.h.b16 %v118
    %v715 = vunpack.c.l.b16 %v119
    %v716 = vunpack.c.h.b16 %v119
    %v717 = vunpack.c.l.b16 %v120
    %v718 = vunpack.c.h.b16 %v120
    %v719 = vunpack.c.l.b16 %v121
    %v720 = vunpack.c.h.b16 %v121
    %v721 = vunpack.c.l.b16 %v122
    %v722 = vunpack.c.h.b16 %v122
    %v723 = vunpack.c.l.b16 %v123
    %v724 = vunpack.c.h.b16 %v123
    %v725 = vunpack.c.l.b16 %v124
    %v726 = vunpack.c.h.b16 %v124
    %v727 = vunpack.c.l.b16 %v125
    %v728 = vunpack.c.h.b16 %v125
    %v729 = vunpack.c.l.b16 %v126
    %v730 = vunpack.c.h.b16 %v126
    %v731 = vunpack.c.l.b16 %v127
    %v732 = vunpack.c.h.b16 %v127
    %v733 = vunpack.c.l.b16 %v128
    %v734 = vunpack.c.h.b16 %v128
    %v735 = vunpack.c.l.b16 %v129
    %v736 = vunpack.c.h.b16 %v129
    %v737 = vunpack.c.l.b16 %v130
    %v738 = vunpack.c.h.b16 %v130
    %v739 = vunpack.c.l.b16 %v131
    %v740 = vunpack.c.h.b16 %v131
    %v741 = vunpack.c.l.b16 %v132
    %v742 = vunpack.c.h.b16 %v132
    %v743 = vunpack.c.l.b16 %v133
    %v744 = vunpack.c.h.b16 %v133
    %v745 = vunpack.c.l.b16 %v134
    %v746 = vunpack.c.h.b16 %v134
    %v747 = vunpack.c.l.b16 %v135
    %v748 = vunpack.c.h.b16 %v135
    %v749 = vunpack.c.l.b16 %v136
    %v750 = vunpack.c.h.b16 %v136
    %v751 = vunpack.c.l.b16 %v137
    %v752 = vunpack.c.h.b16 %v137
    %v753 = vunpack.c.l.b16 %v138
    %v754 = vunpack.c.h.b16 %v138
    %v755 = vunpack.c.l.b16 %v139
    %v756 = vunpack.c.h.b16 %v139
    %v757 = vunpack.c.l.b16 %v140
    %v758 = vunpack.c.h.b16 %v140
    %v759 = vunpack.c.l.b16 %v141
    %v760 = vunpack.c.h.b16 %v141
    %v761 = vunpack.c.l.b16 %v142
    %v762 = vunpack.c.h.b16 %v142
    %v763 = vunpack.c.l.b16 %v143
    %v764 = vunpack.c.h.b16 %v143
    %v765 = vunpack.c.l.b16 %v144
    %v766 = vunpack.c.h.b16 %v144
    %v767 = vunpack.c.l.b16 %v145
    %v768 = vunpack.c.h.b16 %v145
    %v769 = vunpack.c.l.b16 %v146
    %v770 = vunpack.c.h.b16 %v146
    %v771 = vunpack.c.l.b16 %v147
    %v772 = vunpack.c.h.b16 %v147
    %v773 = vunpack.c.l.b16 %v148
    %v774 = vunpack.c.h.b16 %v148
    %v775 = vunpack.c.l.b16 %v149
    %v776 = vunpack.c.h.b16 %v149
    %v777 = vunpack.c.l.b16 %v150
    %v778 = vunpack.c.h.b16 %v150
    %v779 = vunpack.c.l.b16 %v151
    %v780 = vunpack.c.h.b16 %v151
    %v781 = vunpack.c.l.b16 %v152
    %v782 = vunpack.c.h.b16 %v152
    %v783 = vunpack.c.l.b16 %v153
    %v784 = vunpack.c.h.b16 %v153
    %v785 = vunpack.c.l.b16 %v154
    %v786 = vunpack.c.h.b16 %v154
    %v787 = vunpack.c.l.b16 %v155
    %v788 = vunpack.c.h.b16 %v155
    %v789 = vunpack.c.l.b16 %v156
    %v790 = vunpack.c.h.b16 %v156
    %v791 = vunpack.c.l.b16 %v157
    %v792 = vunpack.c.h.b16 %v157
    %v793 = vunpack.c.l.b16 %v158
    %v794 = vunpack.c.h.b16 %v158
    %v795 = vunpack.c.l.b16 %v159
    %v796 = vunpack.c.h.b16 %v159
    %v797 = vunpack.c.l.b16 %v160
    %v798 = vunpack.c.h.b16 %v160
    %v799 = vunpack.c.l.b16 %v161
    %v800 = vunpack.c.h.b16 %v161
    %v801 = vunpack.c.l.b16 %v162
    %v802 = vunpack.c.h.b16 %v162
    %v803 = vunpack.c.l.b16 %v163
    %v804 = vunpack.c.h.b16 %v163
    %v805 = vunpack.c.l.b16 %v164
    %v806 = vunpack.c.h.b16 %v164
    %v807 = vunpack.c.l.b16 %v165
    %v808 = vunpack.c.h.b16 %v165
    %v809 = vunpack.c.l.b16 %v166
    %v810 = vunpack.c.h.b16 %v166
    %v811 = vunpack.c.l.b16 %v167
    %v812 = vunpack.c.h.b16 %v167
    %v813 = vunpack.c.l.b16 %v168
    %v814 = vunpack.c.h.b16 %v168
    %v815 = vunpack.c.l.b16 %v169
    %v816 = vunpack.c.h.b16 %v169
    %v817 = vunpack.c.l.b16 %v170
    %v818 = vunpack.c.h.b16 %v170
    %v819 = vunpack.c.l.b16 %v171
    %v820 = vunpack.c.h.b16 %v171
    %v821 = vunpack.c.l.b16 %v172
    %v822 = vunpack.c.h.b16 %v172
    %v823 = vunpack.c.l.b16 %v173
    %v824 = vunpack.c.h.b16 %v173
    %v825 = vunpack.c.l.b16 %v174
    %v826 = vunpack.c.h.b16 %v174
    %v827 = vunpack.c.l.b16 %v175
    %v828 = vunpack.c.h.b16 %v175
    %v829 = vunpack.c.l.b16 %v176
    %v830 = vunpack.c.h.b16 %v176
    %v831 = vunpack.c.l.b16 %v177
    %v832 = vunpack.c.h.b16 %v177
    %v833 = vunpack.c.l.b16 %v178
    %v834 = vunpack.c.h.b16 %v178
    %v835 = vunpack.c.l.b16 %v179
    %v836 = vunpack.c.h.b16 %v179
    %v837 = vunpack.c.l.b16 %v180
    %v838 = vunpack.c.h.b16 %v180
    %v839 = vunpack.c.l.b16 %v181
    %v840 = vunpack.c.h.b16 %v181
    %v841 = vunpack.c.l.b16 %v182
    %v842 = vunpack.c.h.b16 %v182
    %v843 = vunpack.c.l.b16 %v183
    %v844 = vunpack.c.h.b16 %v183
    %v845 = vunpack.c.l.b16 %v184
    %v846 = vunpack.c.h.b16 %v184
    %v847 = vunpack.c.l.b16 %v185
    %v848 = vunpack.c.h.b16 %v185
    %v849 = vunpack.c.l.b16 %v186
    %v850 = vunpack.c.h.b16 %v186
    %v851 = vunpack.c.l.b16 %v187
    %v852 = vunpack.c.h.b16 %v187
    %v853 = vunpack.c.l.b16 %v188
    %v854 = vunpack.c.h.b16 %v188
    %v855 = vunpack.c.l.b16 %v189
    %v856 = vunpack.c.h.b16 %v189
    %v857 = vunpack.c.l.b16 %v190
    %v858 = vunpack.c.h.b16 %v190
    %v859 = vunpack.c.l.b16 %v191
    %v860 = vunpack.c.h.b16 %v191
    %v861 = vunpack.c.l.b16 %v192
    %v862 = vunpack.c.h.b16 %v192
    %v863 = vunpack.c.l.b16 %v193
    %v864 = vunpack.c.h.b16 %v193
    %v865 = vunpack.c.l.b16 %v194
    %v866 = vunpack.c.h.b16 %v194
    %v867 = vunpack.c.l.b16 %v195
    %v868 = vunpack.c.h.b16 %v195
    %v869 = vunpack.c.l.b16 %v196
    %v870 = vunpack.c.h.b16 %v196
    %v871 = vunpack.c.l.b16 %v197
    %v872 = vunpack.c.h.b16 %v197
    %v873 = vunpack.c.l.b16 %v198
    %v874 = vunpack.c.h.b16 %v198
    %v875 = vunpack.c.l.b16 %v199
    %v876 = vunpack.c.h.b16 %v199
    %v877 = vunpack.c.l.b16 %v200
    %v878 = vunpack.c.h.b16 %v200
    %v879 = vunpack.c.l.b16 %v201
    %v880 = vunpack.c.h.b16 %v201
    %v881 = vunpack.c.l.b16 %v202
    %v882 = vunpack.c.h.b16 %v202
    %v883 = vunpack.c.l.b16 %v203
    %v884 = vunpack.c.h.b16 %v203
    %v885 = vunpack.c.l.b16 %v204
    %v886 = vunpack.c.h.b16 %v204
    %v887 = vunpack.c.l.b16 %v205
    %v888 = vunpack.c.h.b16 %v205
    %v889 = vunpack.c.l.b16 %v206
    %v890 = vunpack.c.h.b16 %v206
    %v891 = vunpack.c.l.b16 %v207
    %v892 = vunpack.c.h.b16 %v207
    %v893 = vunpack.c.l.b16 %v208
    %v894 = vunpack.c.h.b16 %v208
    %v895 = vunpack.c.l.b16 %v209
    %v896 = vunpack.c.h.b16 %v209
    %v897 = vunpack.c.l.b16 %v210
    %v898 = vunpack.c.h.b16 %v210
    %v899 = vunpack.c.l.b16 %v211
    %v900 = vunpack.c.h.b16 %v211
    %v901 = vunpack.c.l.b16 %v212
    %v902 = vunpack.c.h.b16 %v212
    %v903 = vunpack.c.l.b16 %v213
    %v904 = vunpack.c.h.b16 %v213
    %v905 = vunpack.c.l.b16 %v214
    %v906 = vunpack.c.h.b16 %v214
    %v907 = vunpack.c.l.b16 %v215
    %v908 = vunpack.c.h.b16 %v215
    %v909 = vunpack.c.l.b16 %v216
    %v910 = vunpack.c.h.b16 %v216
    %v911 = vunpack.c.l.b16 %v217
    %v912 = vunpack.c.h.b16 %v217
    %v913 = vunpack.c.l.b16 %v218
    %v914 = vunpack.c.h.b16 %v218
    %v915 = vunpack.c.l.b16 %v219
    %v916 = vunpack.c.h.b16 %v219
    %v917 = vunpack.c.l.b16 %v220
    %v918 = vunpack.c.h.b16 %v220
    %v919 = vunpack.c.l.b16 %v221
    %v920 = vunpack.c.h.b16 %v221
    %v921 = vunpack.c.l.b16 %v222
    %v922 = vunpack.c.h.b16 %v222
    %v923 = vunpack.c.l.b16 %v223
    %v924 = vunpack.c.h.b16 %v223
    %v925 = vunpack.c.l.b16 %v224
    %v926 = vunpack.c.h.b16 %v224
    %v927 = vunpack.c.l.b16 %v225
    %v928 = vunpack.c.h.b16 %v225
    %v929 = vunpack.c.l.b16 %v226
    %v930 = vunpack.c.h.b16 %v226
    %v931 = vunpack.c.l.b16 %v227
    %v932 = vunpack.c.h.b16 %v227
    %v933 = vunpack.c.l.b16 %v228
    %v934 = vunpack.c.h.b16 %v228
    %v935 = vunpack.c.l.b16 %v229
    %v936 = vunpack.c.h.b16 %v229
    %v937 = vunpack.c.l.b16 %v230
    %v938 = vunpack.c.h.b16 %v230
    %v939 = vunpack.c.l.b16 %v231
    %v940 = vunpack.c.h.b16 %v231
    %v941 = vunpack.c.l.b16 %v232
    %v942 = vunpack.c.h.b16 %v232
    %v943 = vunpack.c.l.b16 %v233
    %v944 = vunpack.c.h.b16 %v233
    %v945 = vunpack.c.l.b16 %v234
    %v946 = vunpack.c.h.b16 %v234
    %v947 = vunpack.c.l.b16 %v235
    %v948 = vunpack.c.h.b16 %v235
    %v949 = vunpack.c.l.b16 %v236
    %v950 = vunpack.c.h.b16 %v236
    %v951 = vunpack.c.l.b16 %v237
    %v952 = vunpack.c.h.b16 %v237
    %v953 = vunpack.c.l.b16 %v238
    %v954 = vunpack.c.h.b16 %v238
    %v955 = vunpack.c.l.b16 %v239
    %v956 = vunpack.c.h.b16 %v239
    %v957 = vunpack.c.l.b16 %v240
    %v958 = vunpack.c.h.b16 %v240
    %v959 = vunpack.c.l.b16 %v241
    %v960 = vunpack.c.h.b16 %v241
    %v961 = vunpack.c.l.b16 %v242
    %v962 = vunpack.c.h.b16 %v242
    %v963 = vunpack.c.l.b16 %v243
    %v964 = vunpack.c.h.b16 %v243
    %v965 = vunpack.c.l.b16 %v244
    %v966 = vunpack.c.h.b16 %v244
    %v967 = vunpack.c.l.b16 %v245
    %v968 = vunpack.c.h.b16 %v245
    %v969 = vunpack.c.l.b16 %v246
    %v970 = vunpack.c.h.b16 %v246
    %v971 = vunpack.c.l.b16 %v247
    %v972 = vunpack.c.h.b16 %v247
    %v973 = vunpack.c.l.b16 %v248
    %v974 = vunpack.c.h.b16 %v248
    %v975 = vunpack.c.l.b16 %v249
    %v976 = vunpack.c.h.b16 %v249
    %v977 = vunpack.c.l.b16 %v250
    %v978 = vunpack.c.h.b16 %v250
    %v979 = vunpack.c.l.b16 %v251
    %v980 = vunpack.c.h.b16 %v251
    %v981 = vunpack.c.l.b16 %v252
    %v982 = vunpack.c.h.b16 %v252
    %v983 = vunpack.c.l.b16 %v253
    %v984 = vunpack.c.h.b16 %v253
    %v985 = vunpack.c.l.b16 %v254
    %v986 = vunpack.c.h.b16 %v254
    %v987 = vunpack.c.l.b16 %v255
    %v988 = vunpack.c.h.b16 %v255
    %v989 = vunpack.c.l.b16 %v256
    %v990 = vunpack.c.h.b16 %v256
    %v991 = vunpack.c.l.b16 %v257
    %v992 = vunpack.c.h.b16 %v257
    %v993 = vunpack.c.l.b16 %v258
    %v994 = vunpack.c.h.b16 %v258
    %v995 = vunpack.c.l.b16 %v259
    %v996 = vunpack.c.h.b16 %v259
    %v997 = vunpack.c.l.b16 %v260
    %v998 = vunpack.c.h.b16 %v260
    %v999 = vunpack.c.l.b16 %v261
    %v1000 = vunpack.c.h.b16 %v261
    %v1001 = vunpack.c.l.b16 %v262
    %v1002 = vunpack.c.h.b16 %v262
    %v1003 = vunpack.c.l.b16 %v263
    %v1004 = vunpack.c.h.b16 %v263
    %v1005 = vunpack.c.l.b16 %v264
    %v1006 = vunpack.c.h.b16 %v264
    %v1007 = vunpack.c.l.b16 %v265
    %v1008 = vunpack.c.h.b16 %v265
    %v1009 = vunpack.c.l.b16 %v266
    %v1010 = vunpack.c.h.b16 %v266
    %v1011 = vunpack.c.l.b16 %v267
    %v1012 = vunpack.c.h.b16 %v267
    %v1013 = vunpack.c.l.b16 %v268
    %v1014 = vunpack.c.h.b16 %v268
    %v1015 = vunpack.c.l.b16 %v269
    %v1016 = vunpack.c.h.b16 %v269
    %v1017 = vunpack.c.l.b16 %v270
    %v1018 = vunpack.c.h.b16 %v270
    %v1019 = vunpack.c.l.b16 %v271
    %v1020 = vunpack.c.h.b16 %v271
    %v1021 = vunpack.c.l.b16 %v272
    %v1022 = vunpack.c.h.b16 %v272
    %v1023 = vunpack.c.l.b16 %v273
    %v1024 = vunpack.c.h.b16 %v273
    %v1025 = vunpack.c.l.b16 %v274
    %v1026 = vunpack.c.h.b16 %v274
    %v1027 = vunpack.c.l.b16 %v275
    %v1028 = vunpack.c.h.b16 %v275
    %v1029 = vunpack.c.l.b16 %v276
    %v1030 = vunpack.c.h.b16 %v276
    %v1031 = vunpack.c.l.b16 %v277
    %v1032 = vunpack.c.h.b16 %v277
    %v1033 = vunpack.c.l.b16 %v278
    %v1034 = vunpack.c.h.b16 %v278
    %v1035 = vunpack.c.l.b16 %v279
    %v1036 = vunpack.c.h.b16 %v279
    %v1037 = vunpack.c.l.b16 %v280
    %v1038 = vunpack.c.h.b16 %v280
    %v1039 = vunpack.c.l.b16 %v281
    %v1040 = vunpack.c.h.b16 %v281
    %v1041 = vunpack.c.l.b16 %v282
    %v1042 = vunpack.c.h.b16 %v282
    %v1043 = vunpack.c.l.b16 %v283
    %v1044 = vunpack.c.h.b16 %v283
    %v1045 = vunpack.c.l.b16 %v284
    %v1046 = vunpack.c.h.b16 %v284
    %v1047 = vunpack.c.l.b16 %v285
    %v1048 = vunpack.c.h.b16 %v285
    %v1049 = vunpack.c.l.b16 %v286
    %v1050 = vunpack.c.h.b16 %v286
    %v1051 = vunpack.c.l.b16 %v287
    %v1052 = vunpack.c.h.b16 %v287
    %v1053 = vunpack.c.l.b16 %v288
    %v1054 = vunpack.c.h.b16 %v288
    %v1055 = vunpack.c.l.b16 %v289
    %v1056 = vunpack.c.h.b16 %v289
    %v1057 = vunpack.c.l.b16 %v290
    %v1058 = vunpack.c.h.b16 %v290
    %v1059 = vunpack.c.l.b16 %v291
    %v1060 = vunpack.c.h.b16 %v291
    %v1061 = vunpack.c.l.b16 %v292
    %v1062 = vunpack.c.h.b16 %v292
    %v1063 = vunpack.c.l.b16 %v293
    %v1064 = vunpack.c.h.b16 %v293
    %v1065 = vunpack.c.l.b16 %v294
    %v1066 = vunpack.c.h.b16 %v294
    %v1067 = vunpack.c.l.b16 %v295
    %v1068 = vunpack.c.h.b16 %v295
    %v1069 = vunpack.c.l.b16 %v296
    %v1070 = vunpack.c.h.b16 %v296
    %v1071 = vunpack.c.l.b16 %v297
    %v1072 = vunpack.c.h.b16 %v297
    %v1073 = vunpack.c.l.b16 %v298
    %v1074 = vunpack.c.h.b16 %v298
    %v1075 = vunpack.c.l.b16 %v299
    %v1076 = vunpack.c.h.b16 %v299
    %v1077 = vunpack.c.l.b16 %v300
    %v1078 = vunpack.c.h.b16 %v300
    %v1079 = vunpack.c.l.b16 %v301
    %v1080 = vunpack.c.h.b16 %v301
    %v1081 = vunpack.c.l.b16 %v302
    %v1082 = vunpack.c.h.b16 %v302
    %v1083 = vunpack.c.l.b16 %v303
    %v1084 = vunpack.c.h.b16 %v303
    %v1085 = vunpack.c.l.b16 %v304
    %v1086 = vunpack.c.h.b16 %v304
    %v1087 = vunpack.c.l.b16 %v305
    %v1088 = vunpack.c.h.b16 %v305
    %v1089 = vunpack.c.l.b16 %v306
    %v1090 = vunpack.c.h.b16 %v306
    %v1091 = vunpack.c.l.b16 %v307
    %v1092 = vunpack.c.h.b16 %v307
    %v1093 = vunpack.c.l.b16 %v308
    %v1094 = vunpack.c.h.b16 %v308
    %v1095 = vunpack.c.l.b16 %v309
    %v1096 = vunpack.c.h.b16 %v309
    %v1097 = vunpack.c.l.b16 %v310
    %v1098 = vunpack.c.h.b16 %v310
    %v1099 = vunpack.c.l.b16 %v311
    %v1100 = vunpack.c.h.b16 %v311
    %v1101 = vunpack.c.l.b16 %v312
    %v1102 = vunpack.c.h.b16 %v312
    %v1103 = vunpack.c.l.b16 %v313
    %v1104 = vunpack.c.h.b16 %v313
    %v1105 = vunpack.c.l.b16 %v314
    %v1106 = vunpack.c.h.b16 %v314
    %v1107 = vunpack.c.l.b16 %v315
    %v1108 = vunpack.c.h.b16 %v315
    %v1109 = vunpack.c.l.b16 %v316
    %v1110 = vunpack.c.h.b16 %v316
    %v1111 = vunpack.c.l.b16 %v317
    %v1112 = vunpack.c.h.b16 %v317
    %v1113 = vunpack.c.l.b16 %v318
    %v1114 = vunpack.c.h.b16 %v318
    %v1115 = vunpack.c.l.b16 %v319
    %v1116 = vunpack.c.h.b16 %v319
    %v1117 = vunpack.c.l.b16 %v320
    %v1118 = vunpack.c.h.b16 %v320
    %v1119 = vunpack.c.l.b16 %v321
    %v1120 = vunpack.c.h.b16 %v321
    %v1121 = vunpack.c.l.b16 %v322
    %v1122 = vunpack.c.h.b16 %v322
    %v1123 = vunpack.c.l.b16 %v323
    %v1124 = vunpack.c.h.b16 %v323
    %v1125 = vunpack.c.l.b16 %v324
    %v1126 = vunpack.c.h.b16 %v324
    %v1127 = vunpack.c.l.b16 %v325
    %v1128 = vunpack.c.h.b16 %v325
    %v1129 = vunpack.c.l.b16 %v326
    %v1130 = vunpack.c.h.b16 %v326
    %v1131 = vunpack.c.l.b16 %v327
    %v1132 = vunpack.c.h.b16 %v327
    %v1133 = vunpack.c.l.b16 %v328
    %v1134 = vunpack.c.h.b16 %v328
    %v1135 = vunpack.c.l.b16 %v329
    %v1136 = vunpack.c.h.b16 %v329
    %v1137 = vunpack.c.l.b16 %v330
    %v1138 = vunpack.c.h.b16 %v330
    %v1139 = vunpack.c.l.b16 %v331
    %v1140 = vunpack.c.h.b16 %v331
    %v1141 = vunpack.c.l.b16 %v332
    %v1142 = vunpack.c.h.b16 %v332
    %v1143 = vunpack.c.l.b16 %v333
    %v1144 = vunpack.c.h.b16 %v333
    %v1145 = vunpack.c.l.b16 %v334
    %v1146 = vunpack.c.h.b16 %v334
    %v1147 = vunpack.c.l.b16 %v335
    %v1148 = vunpack.c.h.b16 %v335
    %v1149 = vunpack.c.l.b16 %v336
    %v1150 = vunpack.c.h.b16 %v336
    %v1151 = vunpack.c.l.b16 %v337
    %v1152 = vunpack.c.h.b16 %v337
    %v1153 = vunpack.c.l.b16 %v338
    %v1154 = vunpack.c.h.b16 %v338
    %v1155 = vunpack.c.l.b16 %v339
    %v1156 = vunpack.c.h.b16 %v339
    %v1157 = vunpack.c.l.b16 %v340
    %v1158 = vunpack.c.h.b16 %v340
    %v1159 = vunpack.c.l.b16 %v341
    %v1160 = vunpack.c.h.b16 %v341
    %v1161 = vunpack.c.l.b16 %v342
    %v1162 = vunpack.c.h.b16 %v342
    %v1163 = vunpack.c.l.b16 %v343
    %v1164 = vunpack.c.h.b16 %v343
    %v1165 = vunpack.c.l.b16 %v344
    %v1166 = vunpack.c.h.b16 %v344
    %v1167 = vunpack.c.l.b16 %v345
    %v1168 = vunpack.c.h.b16 %v345
    %v1169 = vunpack.c.l.b16 %v346
    %v1170 = vunpack.c.h.b16 %v346
    %v1171 = vunpack.c.l.b16 %v347
    %v1172 = vunpack.c.h.b16 %v347
    %v1173 = vunpack.c.l.b16 %v348
    %v1174 = vunpack.c.h.b16 %v348
    %v1175 = vunpack.c.l.b16 %v349
    %v1176 = vunpack.c.h.b16 %v349
    %v1177 = vunpack.c.l.b16 %v350
    %v1178 = vunpack.c.h.b16 %v350
    %v1179 = vunpack.c.l.b16 %v351
    %v1180 = vunpack.c.h.b16 %v351
    %v1181 = vunpack.c.l.b16 %v352
    %v1182 = vunpack.c.h.b16 %v352
    %v1183 = vunpack.c.l.b16 %v353
    %v1184 = vunpack.c.h.b16 %v353
    %v1185 = vunpack.c.l.b16 %v354
    %v1186 = vunpack.c.h.b16 %v354
    %v1187 = vunpack.c.l.b16 %v355
    %v1188 = vunpack.c.h.b16 %v355
    %v1189 = vunpack.c.l.b16 %v356
    %v1190 = vunpack.c.h.b16 %v356
    %v1191 = vunpack.c.l.b16 %v357
    %v1192 = vunpack.c.h.b16 %v357
    %v1193 = vunpack.c.l.b16 %v358
    %v1194 = vunpack.c.h.b16 %v358
    %v1195 = vunpack.c.l.b16 %v359
    %v1196 = vunpack.c.h.b16 %v359
    %v1197 = vunpack.c.l.b16 %v360
    %v1198 = vunpack.c.h.b16 %v360
    %v1199 = vunpack.c.l.b16 %v361
    %v1200 = vunpack.c.h.b16 %v361
    %v1201 = vunpack.c.l.b16 %v362
    %v1202 = vunpack.c.h.b16 %v362
    %v1203 = vunpack.c.l.b16 %v363
    %v1204 = vunpack.c.h.b16 %v363
    %v1205 = vunpack.c.l.b16 %v364
    %v1206 = vunpack.c.h.b16 %v364
    %v1207 = vunpack.c.l.b16 %v365
    %v1208 = vunpack.c.h.b16 %v365
    %v1209 = vunpack.c.l.b16 %v366
    %v1210 = vunpack.c.h.b16 %v366
    %v1211 = vunpack.c.l.b16 %v367
    %v1212 = vunpack.c.h.b16 %v367
    %v1213 = vunpack.c.l.b16 %v368
    %v1214 = vunpack.c.h.b16 %v368
    %v1215 = vunpack.c.l.b16 %v369
    %v1216 = vunpack.c.h.b16 %v369
    %v1217 = vunpack.c.l.b16 %v370
    %v1218 = vunpack.c.h.b16 %v370
    %v1219 = vunpack.c.l.b16 %v371
    %v1220 = vunpack.c.h.b16 %v371
    %v1221 = vunpack.c.l.b16 %v372
    %v1222 = vunpack.c.h.b16 %v372
    %v1223 = vunpack.c.l.b16 %v373
    %v1224 = vunpack.c.h.b16 %v373
    %v1225 = vunpack.c.l.b16 %v374
    %v1226 = vunpack.c.h.b16 %v374
    %v1227 = vunpack.c.l.b16 %v375
    %v1228 = vunpack.c.h.b16 %v375
    %v1229 = vunpack.c.l.b16 %v376
    %v1230 = vunpack.c.h.b16 %v376
    %v1231 = vunpack.c.l.b16 %v377
    %v1232 = vunpack.c.h.b16 %v377
    %v1233 = vunpack.c.l.b16 %v378
    %v1234 = vunpack.c.h.b16 %v378
    %v1235 = vunpack.c.l.b16 %v379
    %v1236 = vunpack.c.h.b16 %v379
    %v1237 = vunpack.c.l.b16 %v380
    %v1238 = vunpack.c.h.b16 %v380
    %v1239 = vunpack.c.l.b16 %v381
    %v1240 = vunpack.c.h.b16 %v381
    %v1241 = vunpack.c.l.b16 %v382
    %v1242 = vunpack.c.h.b16 %v382
    %v1243 = vunpack.c.l.b16 %v383
    %v1244 = vunpack.c.h.b16 %v383
    %v1245 = vunpack.c.l.b16 %v384
    %v1246 = vunpack.c.h.b16 %v384
    %v1247 = vunpack.c.l.b16 %v385
    %v1248 = vunpack.c.h.b16 %v385
    %v1249 = vunpack.c.l.b16 %v386
    %v1250 = vunpack.c.h.b16 %v386
    %v1251 = vunpack.c.l.b16 %v387
    %v1252 = vunpack.c.h.b16 %v387
    %v1253 = vunpack.c.l.b16 %v388
    %v1254 = vunpack.c.h.b16 %v388
    %v1255 = vunpack.c.l.b16 %v389
    %v1256 = vunpack.c.h.b16 %v389
    %v1257 = vunpack.c.l.b16 %v390
    %v1258 = vunpack.c.h.b16 %v390
    %v1259 = vunpack.c.l.b16 %v391
    %v1260 = vunpack.c.h.b16 %v391
    %v1261 = vunpack.c.l.b16 %v392
    %v1262 = vunpack.c.h.b16 %v392
    %v1263 = vunpack.c.l.b16 %v393
    %v1264 = vunpack.c.h.b16 %v393
    %v1265 = vunpack.c.l.b16 %v394
    %v1266 = vunpack.c.h.b16 %v394
    %v1267 = vunpack.c.l.b16 %v395
    %v1268 = vunpack.c.h.b16 %v395
    %v1269 = vunpack.c.l.b16 %v396
    %v1270 = vunpack.c.h.b16 %v396
    %v1271 = vunpack.c.l.b16 %v397
    %v1272 = vunpack.c.h.b16 %v397
    %v1273 = vunpack.c.l.b16 %v398
    %v1274 = vunpack.c.h.b16 %v398
    %v1275 = vunpack.c.l.b16 %v399
    %v1276 = vunpack.c.h.b16 %v399
    %v1277 = vunpack.c.l.b16 %v400
    %v1278 = vunpack.c.h.b16 %v400
    %v1279 = vpack.c.b16 %v709, %v703
    %v1280 = vpack.c.b16 %v710, %v704
    %v1281 = vpack.c.b16 %v711, %v705
    %v1282 = vpack.c.b16 %v712, %v706
    %v1283 = vpack.c.b16 %v713, %v707
    %v1284 = vpack.c.b16 %v714, %v708
    %v1285 = vpack.c.b16 %v721, %v715
    %v1286 = vpack.c.b16 %v722, %v716
    %v1287 = vpack.c.b16 %v723, %v717
    %v1288 = vpack.c.b16 %v724, %v718
    %v1289 = vpack.c.b16 %v725, %v719
    %v1290 = vpack.c.b16 %v726, %v720
    %v1291 = vpack.c.b16 %v733, %v727
    %v1292 = vpack.c.b16 %v734, %v728
    %v1293 = vpack.c.b16 %v735, %v729
    %v1294 = vpack.c.b16 %v736, %v730
    %v1295 = vpack.c.b16 %v737, %v731
    %v1296 = vpack.c.b16 %v738, %v732
    %v1297 = vpack.c.b16 %v745, %v739
    %v1298 = vpack.c.b16 %v746, %v740
    %v1299 = vpack.c.b16 %v747, %v741
    %v1300 = vpack.c.b16 %v748, %v742
    %v1301 = vpack.c.b16 %v749, %v743
    %v1302 = vpack.c.b16 %v750, %v744
    %v1303 = vpack.c.b16 %v757, %v751
    %v1304 = vpack.c.b16 %v758, %v752
    %v1305 = vpack.c.b16 %v759, %v753
    %v1306 = vpack.c.b16 %v760, %v754
    %v1307 = vpack.c.b16 %v761, %v755
    %v1308 = vpack.c.b16 %v762, %v756
    %v1309 = vpack.c.b16 %v769, %v763
    %v1310 = vpack.c.b16 %v770, %v764
    %v1311 = vpack.c.b16 %v771, %v765
    %v1312 = vpack.c.b16 %v772, %v766
    %v1313 = vpack.c.b16 %v773, %v767
    %v1314 = vpack.c.b16 %v774, %v768
    %v1315 = vpack.c.b16 %v781, %v775
    %v1316 = vpack.c.b16 %v782, %v776
    %v1317 = vpack.c.b16 %v783, %v777
    %v1318 = vpack.c.b16 %v784, %v778
    %v1319 = vpack.c.b16 %v785, %v779
    %v1320 = vpack.c.b16 %v786, %v780
    %v1321 = vpack.c.b16 %v793, %v787
    %v1322 = vpack.c.b16 %v794, %v788
    %v1323 = vpack.c.b16 %v795, %v789
    %v1324 = vpack.c.b16 %v796, %v790
    %v1325 = vpack.c.b16 %v797, %v791
    %v1326 = vpack.c.b16 %v798, %v792
    %v1327 = vpack.c.b16 %v805, %v799
    %v1328 = vpack.c.b16 %v806, %v800
    %v1329 = vpack.c.b16 %v807, %v801
    %v1330 = vpack.c.b16 %v808, %v802
    %v1331 = vpack.c.b16 %v809, %v803
    %v1332 = vpack.c.b16 %v810, %v804
    %v1333 = vpack.c.b16 %v817, %v811
    %v1334 = vpack.c.b16 %v818, %v812
    %v1335 = vpack.c.b16 %v819, %v813
    %v1336 = vpack.c.b16 %v820, %v814
    %v1337 = vpack.c.b16 %v821, %v815
    %v1338 = vpack.c.b16 %v822, %v816
    %v1339 = vpack.c.b16 %v829, %v823
    %v1340 = vpack.c.b16 %v830, %v824
    %v1341 = vpack.c.b16 %v831, %v825
    %v1342 = vpack.c.b16 %v832, %v826
    %v1343 = vpack.c.b16 %v833, %v827
    %v1344 = vpack.c.b16 %v834, %v828
    %v1345 = vpack.c.b16 %v841, %v835
    %v1346 = vpack.c.b16 %v842, %v836
    %v1347 = vpack.c.b16 %v843, %v837
    %v1348 = vpack.c.b16 %v844, %v838
    %v1349 = vpack.c.b16 %v845, %v839
    %v1350 = vpack.c.b16 %v846, %v840
    %v1351 = vpack.c.b16 %v853, %v847
    %v1352 = vpack.c.b16 %v854, %v848
    %v1353 = vpack.c.b16 %v855, %v849
    %v1354 = vpack.c.b16 %v856, %v850
    %v1355 = vpack.c.b16 %v857, %v851
    %v1356 = vpack.c.b16 %v858, %v852
    %v1357 = vpack.c.b16 %v865, %v859
    %v1358 = vpack.c.b16 %v866, %v860
    %v1359 = vpack.c.b16 %v867, %v861
    %v1360 = vpack.c.b16 %v868, %v862
    %v1361 = vpack.c.b16 %v869, %v863
    %v1362 = vpack.c.b16 %v870, %v864
    %v1363 = vpack.c.b16 %v877, %v871
    %v1364 = vpack.c.b16 %v878, %v872
    %v1365 = vpack.c.b16 %v879, %v873
    %v1366 = vpack.c.b16 %v880, %v874
    %v1367 = vpack.c.b16 %v881, %v875
    %v1368 = vpack.c.b16 %v882, %v876
    %v1369 = vpack.c.b16 %v889, %v883
    %v1370 = vpack.c.b16 %v890, %v884
    %v1371 = vpack.c.b16 %v891, %v885
    %v1372 = vpack.c.b16 %v892, %v886
    %v1373 = vpack.c.b16 %v893, %v887
    %v1374 = vpack.c.b16 %v894, %v888
    %v1375 = vpack.c.b16 %v901, %v895
    %v1376 = vpack.c.b16 %v902, %v896
    %v1377 = vpack.c.b16 %v903, %v897
    %v1378 = vpack.c.b16 %v904, %v898
    %v1379 = vpack.c.b16 %v905, %v899
    %v1380 = vpack.c.b16 %v906, %v900
    %v1381 = vpack.c.b16 %v913, %v907
    %v1382 = vpack.c.b16 %v914, %v908
    %v1383 = vpack.c.b16 %v915, %v909
    %v1384 = vpack.c.b16 %v916, %v910
    %v1385 = vpack.c.b16 %v917, %v911
    %v1386 = vpack.c.b16 %v918, %v912
    %v1387 = vpack.c.b16 %v925, %v919
    %v1388 = vpack.c.b16 %v926, %v920
    %v1389 = vpack.c.b16 %v927, %v921
    %v1390 = vpack.c.b16 %v928, %v922
    %v1391 = vpack.c.b16 %v929, %v923
    %v1392 = vpack.c.b16 %v930, %v924
    %v1393 = vpack.c.b16 %v937, %v931
    %v1394 = vpack.c.b16 %v938, %v932
    %v1395 = vpack.c.b16 %v939, %v933
    %v1396 = vpack.c.b16 %v940, %v934
    %v1397 = vpack.c.b16 %v941, %v935
    %v1398 = vpack.c.b16 %v942, %v936
    %v1399 = vpack.c.b16 %v949, %v943
    %v1400 = vpack.c.b16 %v950, %v944
    %v1401 = vpack.c.b16 %v951, %v945
    %v1402 = vpack.c.b16 %v952, %v946
    %v1403 = vpack.c.b16 %v953, %v947
    %v1404 = vpack.c.b16 %v954, %v948
    %v1405 = vpack.c.b16 %v961, %v955
    %v1406 = vpack.c.b16 %v962, %v956
    %v1407 = vpack.c.b16 %v963, %v957
    %v1408 = vpack.c.b16 %v964, %v958
    %v1409 = vpack.c.b16 %v965, %v959
    %v1410 = vpack.c.b16 %v966, %v960
    %v1411 = vpack.c.b16 %v973, %v967
    %v1412 = vpack.c.b16 %v974, %v968
    %v1413 = vpack.c.b16 %v975, %v969
    %v1414 = vpack.c.b16 %v976, %v970
    %v1415 = vpack.c.b16 %v977, %v971
    %v1416 = vpack.c.b16 %v978, %v972
    %v1417 = vpack.c.b16 %v985, %v979
    %v1418 = vpack.c.b16 %v986, %v980
    %v1419 = vpack.c.b16 %v987, %v981
    %v1420 = vpack.c.b16 %v988, %v982
    %v1421 = vpack.c.b16 %v989, %v983
    %v1422 = vpack.c.b16 %v990, %v984
    %v1423 = vpack.c.b16 %v997, %v991
    %v1424 = vpack.c.b16 %v998, %v992
    %v1425 = vpack.c.b16 %v999, %v993
    %v1426 = vpack.c.b16 %v1000, %v994
    %v1427 = vpack.c.b16 %v1001, %v995
    %v1428 = vpack.c.b16 %v1002, %v996
    %v1429 = vpack.c.b16 %v1009, %v1003
    %v1430 = vpack.c.b16 %v1010, %v1004
    %v1431 = vpack.c.b16 %v1011, %v1005
    %v1432 = vpack.c.b16 %v1012, %v1006
    %v1433 = vpack.c.b16 %v1013, %v1007
    %v1434 = vpack.c.b16 %v1014, %v1008
    %v1435 = vpack.c.b16 %v1021, %v1015
    %v1436 = vpack.c.b16 %v1022, %v1016
    %v1437 = vpack.c.b16 %v1023, %v1017
    %v1438 = vpack.c.b16 %v1024, %v1018
    %v1439 = vpack.c.b16 %v1025, %v1019
    %v1440 = vpack.c.b16 %v1026, %v1020
    %v1441 = vpack.c.b16 %v1033, %v1027
    %v1442 = vpack.c.b16 %v1034, %v1028
    %v1443 = vpack.c.b16 %v1035, %v1029
    %v1444 = vpack.c.b16 %v1036, %v1030
    %v1445 = vpack.c.b16 %v1037, %v1031
    %v1446 = vpack.c.b16 %v1038, %v1032
    %v1447 = vpack.c.b16 %v1045, %v1039
    %v1448 = vpack.c.b16 %v1046, %v1040
    %v1449 = vpack.c.b16 %v1047, %v1041
    %v1450 = vpack.c.b16 %v1048, %v1042
    %v1451 = vpack.c.b16 %v1049, %v1043
    %v1452 = vpack.c.b16 %v1050, %v1044
    %v1453 = vpack.c.b16 %v1057, %v1051
    %v1454 = vpack.c.b16 %v1058, %v1052
    %v1455 = vpack.c.b16 %v1059, %v1053
    %v1456 = vpack.c.b16 %v1060, %v1054
    %v1457 = vpack.c.b16 %v1061, %v1055
    %v1458 = vpack.c.b16 %v1062, %v1056
    %v1459 = vpack.c.b16 %v1069, %v1063
    %v1460 = vpack.c.b16 %v1070, %v1064
    %v1461 = vpack.c.b16 %v1071, %v1065
    %v1462 = vpack.c.b16 %v1072, %v1066
    %v1463 = vpack.c.b16 %v1073, %v1067
    %v1464 = vpack.c.b16 %v1074, %v1068
    %v1465 = vpack.c.b16 %v1081, %v1075
    %v1466 = vpack.c.b16 %v1082, %v1076
    %v1467 = vpack.c.b16 %v1083, %v1077
    %v1468 = vpack.c.b16 %v1084, %v1078
    %v1469 = vpack.c.b16 %v1085, %v1079
    %v1470 = vpack.c.b16 %v1086, %v1080
    %v1471 = vpack.c.b16 %v1093, %v1087
    %v1472 = vpack.c.b16 %v1094, %v1088
    %v1473 = vpack.c.b16 %v1095, %v1089
    %v1474 = vpack.c.b16 %v1096, %v1090
    %v1475 = vpack.c.b16 %v1097, %v1091
    %v1476 = vpack.c.b16 %v1098, %v1092
    %v1477 = vpack.c.b16 %v1105, %v1099
    %v1478 = vpack.c.b16 %v1106, %v1100
    %v1479 = vpack.c.b16 %v1107, %v1101
    %v1480 = vpack.c.b16 %v1108, %v1102
    %v1481 = vpack.c.b16 %v1109, %v1103
    %v1482 = vpack.c.b16 %v1110, %v1104
    %v1483 = vpack.c.b16 %v1117, %v1111
    %v1484 = vpack.c.b16 %v1118, %v1112
    %v1485 = vpack.c.b16 %v1119, %v1113
    %v1486 = vpack.c.b16 %v1120, %v1114
    %v1487 = vpack.c.b16 %v1121, %v1115
    %v1488 = vpack.c.b16 %v1122, %v1116
    %v1489 = vpack.c.b16 %v1129, %v1123
    %v1490 = vpack.c.b16 %v1130, %v1124
    %v1491 = vpack.c.b16 %v1131, %v1125
    %v1492 = vpack.c.b16 %v1132, %v1126
    %v1493 = vpack.c.b16 %v1133, %v1127
    %v1494 = vpack.c.b16 %v1134, %v1128
    %v1495 = vpack.c.b16 %v1141, %v1135
    %v1496 = vpack.c.b16 %v1142, %v1136
    %v1497 = vpack.c.b16 %v1143, %v1137
    %v1498 = vpack.c.b16 %v1144, %v1138
    %v1499 = vpack.c.b16 %v1145, %v1139
    %v1500 = vpack.c.b16 %v1146, %v1140
    %v1501 = vpack.c.b16 %v1153, %v1147
    %v1502 = vpack.c.b16 %v1154, %v1148
    %v1503 = vpack.c.b16 %v1155, %v1149
    %v1504 = vpack.c.b16 %v1156, %v1150
    %v1505 = vpack.c.b16 %v1157, %v1151
    %v1506 = vpack.c.b16 %v1158, %v1152
    %v1507 = vpack.c.b16 %v1165, %v1159
    %v1508 = vpack.c.b16 %v1166, %v1160
    %v1509 = vpack.c.b16 %v1167, %v1161
    %v1510 = vpack.c.b16 %v1168, %v1162
    %v1511 = vpack.c.b16 %v1169, %v1163
    %v1512 = vpack.c.b16 %v1170, %v1164
    %v1513 = vpack.c.b16 %v1177, %v1171
    %v1514 = vpack.c.b16 %v1178, %v1172
    %v1515 = vpack.c.b16 %v1179, %v1173
    %v1516 = vpack.c.b16 %v1180, %v1174
    %v1517 = vpack.c.b16 %v1181, %v1175
    %v1518 = vpack.c.b16 %v1182, %v1176
    %v1519 = vpack.c.b16 %v1189, %v1183
    %v1520 = vpack.c.b16 %v1190, %v1184
    %v1521 = vpack.c.b16 %v1191, %v1185
    %v1522 = vpack.c.b16 %v1192, %v1186
    %v1523 = vpack.c.b16 %v1193, %v1187
    %v1524 = vpack.c.b16 %v1194, %v1188
    %v1525 = vpack.c.b16 %v1201, %v1195
    %v1526 = vpack.c.b16 %v1202, %v1196
    %v1527 = vpack.c.b16 %v1203, %v1197
    %v1528 = vpack.c.b16 %v1204, %v1198
    %v1529 = vpack.c.b16 %v1205, %v1199
    %v1530 = vpack.c.b16 %v1206, %v1200
    %v1531 = vpack.c.b16 %v1213, %v1207
    %v1532 = vpack.c.b16 %v1214, %v1208
    %v1533 = vpack.c.b16 %v1215, %v1209
    %v1534 = vpack.c.b16 %v1216, %v1210
    %v1535 = vpack.c.b16 %v1217, %v1211
    %v1536 = vpack.c.b16 %v1218, %v1212
    %v1537 = vpack.c.b16 %v1225, %v1219
    %v1538 = vpack.c.b16 %v1226, %v1220
    %v1539 = vpack.c.b16 %v1227, %v1221
    %v1540 = vpack.c.b16 %v1228, %v1222
    %v1541 = vpack.c.b16 %v1229, %v1223
    %v1542 = vpack.c.b16 %v1230, %v1224
    %v1543 = vpack.c.b16 %v1237, %v1231
    %v1544 = vpack.c.b16 %v1238, %v1232
    %v1545 = vpack.c.b16 %v1239, %v1233
    %v1546 = vpack.c.b16 %v1240, %v1234
    %v1547 = vpack.c.b16 %v1241, %v1235
    %v1548 = vpack.c.b16 %v1242, %v1236
    %v1549 = vpack.c.b16 %v1249, %v1243
    %v1550 = vpack.c.b16 %v1250, %v1244
    %v1551 = vpack.c.b16 %v1251, %v1245
    %v1552 = vpack.c.b16 %v1252, %v1246
    %v1553 = vpack.c.b16 %v1253, %v1247
    %v1554 = vpack.c.b16 %v1254, %v1248
    %v1555 = vpack.c.b16 %v1261, %v1255
    %v1556 = vpack.c.b16 %v1262, %v1256
    %v1557 = vpack.c.b16 %v1263, %v1257
    %v1558 = vpack.c.b16 %v1264, %v1258
    %v1559 = vpack.c.b16 %v1265, %v1259
    %v1560 = vpack.c.b16 %v1266, %v1260
    %v1561 = vpack.c.b16 %v1273, %v1267
    %v1562 = vpack.c.b16 %v1274, %v1268
    %v1563 = vpack.c.b16 %v1275, %v1269
    %v1564 = vpack.c.b16 %v1276, %v1270
    %v1565 = vpack.c.b16 %v1277, %v1271
    %v1566 = vpack.c.b16 %v1278, %v1272
    %1855 = vmatpush.bf16.msra.mxu0 %v1321
    %1856 = vmatpush.bf16.msra.mxu0 %v1315
    %1857 = vmatpush.bf16.msra.mxu0 %v1309
    %1858 = vmatpush.bf16.msra.mxu0 %v1303
    %1859 = vmatpush.bf16.msra.mxu0 %v1297
    %1860 = vmatpush.bf16.msra.mxu0 %v1291
    %1861 = vmatpush.bf16.msra.mxu0 %v1285
    %1862 = vmatpush.bf16.msra.mxu0 %v1279
    %1863 = vmatmul.bf16.gmra.mxu0 %v107
    %v1864 = vpop.f32.mrf.mxu0
    %v1865 = vadd.f32 %v403, %v1864
    %v1866 = vpop.f32.mrf.mxu0
    %v1867 = vadd.f32 %v403, %v1866
    %1868 = vdwg.mxu0
    %1869 = vmatpush.bf16.msra.mxu0 %v1369
    %1870 = vmatpush.bf16.msra.mxu0 %v1363
    %1871 = vmatpush.bf16.msra.mxu0 %v1357
    %1872 = vmatpush.bf16.msra.mxu0 %v1351
    %1873 = vmatpush.bf16.msra.mxu0 %v1345
    %1874 = vmatpush.bf16.msra.mxu0 %v1339
    %1875 = vmatpush.bf16.msra.mxu0 %v1333
    %1876 = vmatpush.bf16.msra.mxu0 %v1327
    %1877 = vmatmul.bf16.gmra.mxu0 %v108
    %v1878 = vpop.f32.mrf.mxu0
    %v1879 = vadd.f32 %v1865, %v1878
    %v1880 = vpop.f32.mrf.mxu0
    %v1881 = vadd.f32 %v1867, %v1880
    %1882 = vdwg.mxu0
    %1883 = vmatpush.bf16.msra.mxu0 %v1417
    %1884 = vmatpush.bf16.msra.mxu0 %v1411
    %1885 = vmatpush.bf16.msra.mxu0 %v1405
    %1886 = vmatpush.bf16.msra.mxu0 %v1399
    %1887 = vmatpush.bf16.msra.mxu0 %v1393
    %1888 = vmatpush.bf16.msra.mxu0 %v1387
    %1889 = vmatpush.bf16.msra.mxu0 %v1381
    %1890 = vmatpush.bf16.msra.mxu0 %v1375
    %1891 = vmatmul.bf16.gmra.mxu0 %v109
    %v1892 = vpop.f32.mrf.mxu0
    %v1893 = vadd.f32 %v1879, %v1892
    %v1894 = vpop.f32.mrf.mxu0
    %v1895 = vadd.f32 %v1881, %v1894
    %1896 = vdwg.mxu0
    %1897 = vmatpush.bf16.msra.mxu0 %v1465
    %1898 = vmatpush.bf16.msra.mxu0 %v1459
    %1899 = vmatpush.bf16.msra.mxu0 %v1453
    %1900 = vmatpush.bf16.msra.mxu0 %v1447
    %1901 = vmatpush.bf16.msra.mxu0 %v1441
    %1902 = vmatpush.bf16.msra.mxu0 %v1435
    %1903 = vmatpush.bf16.msra.mxu0 %v1429
    %1904 = vmatpush.bf16.msra.mxu0 %v1423
    %1905 = vmatmul.bf16.gmra.mxu0 %v110
    %v1906 = vpop.f32.mrf.mxu0
    %v1907 = vadd.f32 %v1893, %v1906
    %v1908 = vpop.f32.mrf.mxu0
    %v1909 = vadd.f32 %v1895, %v1908
    %1910 = vdwg.mxu0
    %1911 = vmatpush.bf16.msra.mxu0 %v1513
    %1912 = vmatpush.bf16.msra.mxu0 %v1507
    %1913 = vmatpush.bf16.msra.mxu0 %v1501
    %1914 = vmatpush.bf16.msra.mxu0 %v1495
    %1915 = vmatpush.bf16.msra.mxu0 %v1489
    %1916 = vmatpush.bf16.msra.mxu0 %v1483
    %1917 = vmatpush.bf16.msra.mxu0 %v1477
    %1918 = vmatpush.bf16.msra.mxu0 %v1471
    %1919 = vmatmul.bf16.gmra.mxu0 %v111
    %v1920 = vpop.f32.mrf.mxu0
    %v1921 = vadd.f32 %v1907, %v1920
    %v1922 = vpop.f32.mrf.mxu0
    %v1923 = vadd.f32 %v1909, %v1922
    %1924 = vdwg.mxu0
    %1925 = vmatpush.bf16.msra.mxu0 %v1561
    %1926 = vmatpush.bf16.msra.mxu0 %v1555
    %1927 = vmatpush.bf16.msra.mxu0 %v1549
    %1928 = vmatpush.bf16.msra.mxu0 %v1543
    %1929 = vmatpush.bf16.msra.mxu0 %v1537
    %1930 = vmatpush.bf16.msra.mxu0 %v1531
    %1931 = vmatpush.bf16.msra.mxu0 %v1525
    %1932 = vmatpush.bf16.msra.mxu0 %v1519
    %1933 = vmatmul.bf16.gmra.mxu0 %v112
    %v1934 = vpop.f32.mrf.mxu0
    %v1935 = vadd.f32 %v1921, %v1934
    %v1936 = vpop.f32.mrf.mxu0
    %v1937 = vadd.f32 %v1923, %v1936
    %1938 = vdwg.mxu0
    %1939 = vmatpush.bf16.msra.mxu0 %v1322
    %1940 = vmatpush.bf16.msra.mxu0 %v1316
    %1941 = vmatpush.bf16.msra.mxu0 %v1310
    %1942 = vmatpush.bf16.msra.mxu0 %v1304
    %1943 = vmatpush.bf16.msra.mxu0 %v1298
    %1944 = vmatpush.bf16.msra.mxu0 %v1292
    %1945 = vmatpush.bf16.msra.mxu0 %v1286
    %1946 = vmatpush.bf16.msra.mxu0 %v1280
    %1947 = vmatmul.bf16.gmra.mxu0 %v107
    %v1948 = vpop.f32.mrf.mxu0
    %v1949 = vadd.f32 %v404, %v1948
    %v1950 = vpop.f32.mrf.mxu0
    %v1951 = vadd.f32 %v404, %v1950
    %1952 = vdwg.mxu0
    %1953 = vmatpush.bf16.msra.mxu0 %v1370
    %1954 = vmatpush.bf16.msra.mxu0 %v1364
    %1955 = vmatpush.bf16.msra.mxu0 %v1358
    %1956 = vmatpush.bf16.msra.mxu0 %v1352
    %1957 = vmatpush.bf16.msra.mxu0 %v1346
    %1958 = vmatpush.bf16.msra.mxu0 %v1340
    %1959 = vmatpush.bf16.msra.mxu0 %v1334
    %1960 = vmatpush.bf16.msra.mxu0 %v1328
    %1961 = vmatmul.bf16.gmra.mxu0 %v108
    %v1962 = vpop.f32.mrf.mxu0
    %v1963 = vadd.f32 %v1949, %v1962
    %v1964 = vpop.f32.mrf.mxu0
    %v1965 = vadd.f32 %v1951, %v1964
    %1966 = vdwg.mxu0
    %1967 = vmatpush.bf16.msra.mxu0 %v1418
    %1968 = vmatpush.bf16.msra.mxu0 %v1412
    %1969 = vmatpush.bf16.msra.mxu0 %v1406
    %1970 = vmatpush.bf16.msra.mxu0 %v1400
    %1971 = vmatpush.bf16.msra.mxu0 %v1394
    %1972 = vmatpush.bf16.msra.mxu0 %v1388
    %1973 = vmatpush.bf16.msra.mxu0 %v1382
    %1974 = vmatpush.bf16.msra.mxu0 %v1376
    %1975 = vmatmul.bf16.gmra.mxu0 %v109
    %v1976 = vpop.f32.mrf.mxu0
    %v1977 = vadd.f32 %v1963, %v1976
    %v1978 = vpop.f32.mrf.mxu0
    %v1979 = vadd.f32 %v1965, %v1978
    %1980 = vdwg.mxu0
    %1981 = vmatpush.bf16.msra.mxu0 %v1466
    %1982 = vmatpush.bf16.msra.mxu0 %v1460
    %1983 = vmatpush.bf16.msra.mxu0 %v1454
    %1984 = vmatpush.bf16.msra.mxu0 %v1448
    %1985 = vmatpush.bf16.msra.mxu0 %v1442
    %1986 = vmatpush.bf16.msra.mxu0 %v1436
    %1987 = vmatpush.bf16.msra.mxu0 %v1430
    %1988 = vmatpush.bf16.msra.mxu0 %v1424
    %1989 = vmatmul.bf16.gmra.mxu0 %v110
    %v1990 = vpop.f32.mrf.mxu0
    %v1991 = vadd.f32 %v1977, %v1990
    %v1992 = vpop.f32.mrf.mxu0
    %v1993 = vadd.f32 %v1979, %v1992
    %1994 = vdwg.mxu0
    %1995 = vmatpush.bf16.msra.mxu0 %v1514
    %1996 = vmatpush.bf16.msra.mxu0 %v1508
    %1997 = vmatpush.bf16.msra.mxu0 %v1502
    %1998 = vmatpush.bf16.msra.mxu0 %v1496
    %1999 = vmatpush.bf16.msra.mxu0 %v1490
    %2000 = vmatpush.bf16.msra.mxu0 %v1484
    %2001 = vmatpush.bf16.msra.mxu0 %v1478
    %2002 = vmatpush.bf16.msra.mxu0 %v1472
    %2003 = vmatmul.bf16.gmra.mxu0 %v111
    %v2004 = vpop.f32.mrf.mxu0
    %v2005 = vadd.f32 %v1991, %v2004
    %v2006 = vpop.f32.mrf.mxu0
    %v2007 = vadd.f32 %v1993, %v2006
    %2008 = vdwg.mxu0
    %2009 = vmatpush.bf16.msra.mxu0 %v1562
    %2010 = vmatpush.bf16.msra.mxu0 %v1556
    %2011 = vmatpush.bf16.msra.mxu0 %v1550
    %2012 = vmatpush.bf16.msra.mxu0 %v1544
    %2013 = vmatpush.bf16.msra.mxu0 %v1538
    %2014 = vmatpush.bf16.msra.mxu0 %v1532
    %2015 = vmatpush.bf16.msra.mxu0 %v1526
    %2016 = vmatpush.bf16.msra.mxu0 %v1520
    %2017 = vmatmul.bf16.gmra.mxu0 %v112
    %v2018 = vpop.f32.mrf.mxu0
    %v2019 = vadd.f32 %v2005, %v2018
    %v2020 = vpop.f32.mrf.mxu0
    %v2021 = vadd.f32 %v2007, %v2020
    %2022 = vdwg.mxu0
    %2023 = vmatpush.bf16.msra.mxu0 %v1323
    %2024 = vmatpush.bf16.msra.mxu0 %v1317
    %2025 = vmatpush.bf16.msra.mxu0 %v1311
    %2026 = vmatpush.bf16.msra.mxu0 %v1305
    %2027 = vmatpush.bf16.msra.mxu0 %v1299
    %2028 = vmatpush.bf16.msra.mxu0 %v1293
    %2029 = vmatpush.bf16.msra.mxu0 %v1287
    %2030 = vmatpush.bf16.msra.mxu0 %v1281
    %2031 = vmatmul.bf16.gmra.mxu0 %v107
    %v2032 = vpop.f32.mrf.mxu0
    %v2033 = vadd.f32 %v405, %v2032
    %v2034 = vpop.f32.mrf.mxu0
    %v2035 = vadd.f32 %v405, %v2034
    %2036 = vdwg.mxu0
    %2037 = vmatpush.bf16.msra.mxu0 %v1371
    %2038 = vmatpush.bf16.msra.mxu0 %v1365
    %2039 = vmatpush.bf16.msra.mxu0 %v1359
    %2040 = vmatpush.bf16.msra.mxu0 %v1353
    %2041 = vmatpush.bf16.msra.mxu0 %v1347
    %2042 = vmatpush.bf16.msra.mxu0 %v1341
    %2043 = vmatpush.bf16.msra.mxu0 %v1335
    %2044 = vmatpush.bf16.msra.mxu0 %v1329
    %2045 = vmatmul.bf16.gmra.mxu0 %v108
    %v2046 = vpop.f32.mrf.mxu0
    %v2047 = vadd.f32 %v2033, %v2046
    %v2048 = vpop.f32.mrf.mxu0
    %v2049 = vadd.f32 %v2035, %v2048
    %2050 = vdwg.mxu0
    %2051 = vmatpush.bf16.msra.mxu0 %v1419
    %2052 = vmatpush.bf16.msra.mxu0 %v1413
    %2053 = vmatpush.bf16.msra.mxu0 %v1407
    %2054 = vmatpush.bf16.msra.mxu0 %v1401
    %2055 = vmatpush.bf16.msra.mxu0 %v1395
    %2056 = vmatpush.bf16.msra.mxu0 %v1389
    %2057 = vmatpush.bf16.msra.mxu0 %v1383
    %2058 = vmatpush.bf16.msra.mxu0 %v1377
    %2059 = vmatmul.bf16.gmra.mxu0 %v109
    %v2060 = vpop.f32.mrf.mxu0
    %v2061 = vadd.f32 %v2047, %v2060
    %v2062 = vpop.f32.mrf.mxu0
    %v2063 = vadd.f32 %v2049, %v2062
    %2064 = vdwg.mxu0
    %2065 = vmatpush.bf16.msra.mxu0 %v1467
    %2066 = vmatpush.bf16.msra.mxu0 %v1461
    %2067 = vmatpush.bf16.msra.mxu0 %v1455
    %2068 = vmatpush.bf16.msra.mxu0 %v1449
    %2069 = vmatpush.bf16.msra.mxu0 %v1443
    %2070 = vmatpush.bf16.msra.mxu0 %v1437
    %2071 = vmatpush.bf16.msra.mxu0 %v1431
    %2072 = vmatpush.bf16.msra.mxu0 %v1425
    %2073 = vmatmul.bf16.gmra.mxu0 %v110
    %v2074 = vpop.f32.mrf.mxu0
    %v2075 = vadd.f32 %v2061, %v2074
    %v2076 = vpop.f32.mrf.mxu0
    %v2077 = vadd.f32 %v2063, %v2076
    %2078 = vdwg.mxu0
    %2079 = vmatpush.bf16.msra.mxu0 %v1515
    %2080 = vmatpush.bf16.msra.mxu0 %v1509
    %2081 = vmatpush.bf16.msra.mxu0 %v1503
    %2082 = vmatpush.bf16.msra.mxu0 %v1497
    %2083 = vmatpush.bf16.msra.mxu0 %v1491
    %2084 = vmatpush.bf16.msra.mxu0 %v1485
    %2085 = vmatpush.bf16.msra.mxu0 %v1479
    %2086 = vmatpush.bf16.msra.mxu0 %v1473
    %2087 = vmatmul.bf16.gmra.mxu0 %v111
    %v2088 = vpop.f32.mrf.mxu0
    %v2089 = vadd.f32 %v2075, %v2088
    %v2090 = vpop.f32.mrf.mxu0
    %v2091 = vadd.f32 %v2077, %v2090
    %2092 = vdwg.mxu0
    %2093 = vmatpush.bf16.msra.mxu0 %v1563
    %2094 = vmatpush.bf16.msra.mxu0 %v1557
    %2095 = vmatpush.bf16.msra.mxu0 %v1551
    %2096 = vmatpush.bf16.msra.mxu0 %v1545
    %2097 = vmatpush.bf16.msra.mxu0 %v1539
    %2098 = vmatpush.bf16.msra.mxu0 %v1533
    %2099 = vmatpush.bf16.msra.mxu0 %v1527
    %2100 = vmatpush.bf16.msra.mxu0 %v1521
    %2101 = vmatmul.bf16.gmra.mxu0 %v112
    %v2102 = vpop.f32.mrf.mxu0
    %v2103 = vadd.f32 %v2089, %v2102
    %v2104 = vpop.f32.mrf.mxu0
    %v2105 = vadd.f32 %v2091, %v2104
    %2106 = vdwg.mxu0
    %2107 = vmatpush.bf16.msra.mxu0 %v1324
    %2108 = vmatpush.bf16.msra.mxu0 %v1318
    %2109 = vmatpush.bf16.msra.mxu0 %v1312
    %2110 = vmatpush.bf16.msra.mxu0 %v1306
    %2111 = vmatpush.bf16.msra.mxu0 %v1300
    %2112 = vmatpush.bf16.msra.mxu0 %v1294
    %2113 = vmatpush.bf16.msra.mxu0 %v1288
    %2114 = vmatpush.bf16.msra.mxu0 %v1282
    %2115 = vmatmul.bf16.gmra.mxu0 %v107
    %v2116 = vpop.f32.mrf.mxu0
    %v2117 = vadd.f32 %v406, %v2116
    %v2118 = vpop.f32.mrf.mxu0
    %v2119 = vadd.f32 %v406, %v2118
    %2120 = vdwg.mxu0
    %2121 = vmatpush.bf16.msra.mxu0 %v1372
    %2122 = vmatpush.bf16.msra.mxu0 %v1366
    %2123 = vmatpush.bf16.msra.mxu0 %v1360
    %2124 = vmatpush.bf16.msra.mxu0 %v1354
    %2125 = vmatpush.bf16.msra.mxu0 %v1348
    %2126 = vmatpush.bf16.msra.mxu0 %v1342
    %2127 = vmatpush.bf16.msra.mxu0 %v1336
    %2128 = vmatpush.bf16.msra.mxu0 %v1330
    %2129 = vmatmul.bf16.gmra.mxu0 %v108
    %v2130 = vpop.f32.mrf.mxu0
    %v2131 = vadd.f32 %v2117, %v2130
    %v2132 = vpop.f32.mrf.mxu0
    %v2133 = vadd.f32 %v2119, %v2132
    %2134 = vdwg.mxu0
    %2135 = vmatpush.bf16.msra.mxu0 %v1420
    %2136 = vmatpush.bf16.msra.mxu0 %v1414
    %2137 = vmatpush.bf16.msra.mxu0 %v1408
    %2138 = vmatpush.bf16.msra.mxu0 %v1402
    %2139 = vmatpush.bf16.msra.mxu0 %v1396
    %2140 = vmatpush.bf16.msra.mxu0 %v1390
    %2141 = vmatpush.bf16.msra.mxu0 %v1384
    %2142 = vmatpush.bf16.msra.mxu0 %v1378
    %2143 = vmatmul.bf16.gmra.mxu0 %v109
    %v2144 = vpop.f32.mrf.mxu0
    %v2145 = vadd.f32 %v2131, %v2144
    %v2146 = vpop.f32.mrf.mxu0
    %v2147 = vadd.f32 %v2133, %v2146
    %2148 = vdwg.mxu0
    %2149 = vmatpush.bf16.msra.mxu0 %v1468
    %2150 = vmatpush.bf16.msra.mxu0 %v1462
    %2151 = vmatpush.bf16.msra.mxu0 %v1456
    %2152 = vmatpush.bf16.msra.mxu0 %v1450
    %2153 = vmatpush.bf16.msra.mxu0 %v1444
    %2154 = vmatpush.bf16.msra.mxu0 %v1438
    %2155 = vmatpush.bf16.msra.mxu0 %v1432
    %2156 = vmatpush.bf16.msra.mxu0 %v1426
    %2157 = vmatmul.bf16.gmra.mxu0 %v110
    %v2158 = vpop.f32.mrf.mxu0
    %v2159 = vadd.f32 %v2145, %v2158
    %v2160 = vpop.f32.mrf.mxu0
    %v2161 = vadd.f32 %v2147, %v2160
    %2162 = vdwg.mxu0
    %2163 = vmatpush.bf16.msra.mxu0 %v1516
    %2164 = vmatpush.bf16.msra.mxu0 %v1510
    %2165 = vmatpush.bf16.msra.mxu0 %v1504
    %2166 = vmatpush.bf16.msra.mxu0 %v1498
    %2167 = vmatpush.bf16.msra.mxu0 %v1492
    %2168 = vmatpush.bf16.msra.mxu0 %v1486
    %2169 = vmatpush.bf16.msra.mxu0 %v1480
    %2170 = vmatpush.bf16.msra.mxu0 %v1474
    %2171 = vmatmul.bf16.gmra.mxu0 %v111
    %v2172 = vpop.f32.mrf.mxu0
    %v2173 = vadd.f32 %v2159, %v2172
    %v2174 = vpop.f32.mrf.mxu0
    %v2175 = vadd.f32 %v2161, %v2174
    %2176 = vdwg.mxu0
    %2177 = vmatpush.bf16.msra.mxu0 %v1564
    %2178 = vmatpush.bf16.msra.mxu0 %v1558
    %2179 = vmatpush.bf16.msra.mxu0 %v1552
    %2180 = vmatpush.bf16.msra.mxu0 %v1546
    %2181 = vmatpush.bf16.msra.mxu0 %v1540
    %2182 = vmatpush.bf16.msra.mxu0 %v1534
    %2183 = vmatpush.bf16.msra.mxu0 %v1528
    %2184 = vmatpush.bf16.msra.mxu0 %v1522
    %2185 = vmatmul.bf16.gmra.mxu0 %v112
    %v2186 = vpop.f32.mrf.mxu0
    %v2187 = vadd.f32 %v2173, %v2186
    %v2188 = vpop.f32.mrf.mxu0
    %v2189 = vadd.f32 %v2175, %v2188
    %2190 = vdwg.mxu0
    %2191 = vmatpush.bf16.msra.mxu0 %v1325
    %2192 = vmatpush.bf16.msra.mxu0 %v1319
    %2193 = vmatpush.bf16.msra.mxu0 %v1313
    %2194 = vmatpush.bf16.msra.mxu0 %v1307
    %2195 = vmatpush.bf16.msra.mxu0 %v1301
    %2196 = vmatpush.bf16.msra.mxu0 %v1295
    %2197 = vmatpush.bf16.msra.mxu0 %v1289
    %2198 = vmatpush.bf16.msra.mxu0 %v1283
    %2199 = vmatmul.bf16.gmra.mxu0 %v107
    %v2200 = vpop.f32.mrf.mxu0
    %v2201 = vadd.f32 %v407, %v2200
    %v2202 = vpop.f32.mrf.mxu0
    %v2203 = vadd.f32 %v407, %v2202
    %2204 = vdwg.mxu0
    %2205 = vmatpush.bf16.msra.mxu0 %v1373
    %2206 = vmatpush.bf16.msra.mxu0 %v1367
    %2207 = vmatpush.bf16.msra.mxu0 %v1361
    %2208 = vmatpush.bf16.msra.mxu0 %v1355
    %2209 = vmatpush.bf16.msra.mxu0 %v1349
    %2210 = vmatpush.bf16.msra.mxu0 %v1343
    %2211 = vmatpush.bf16.msra.mxu0 %v1337
    %2212 = vmatpush.bf16.msra.mxu0 %v1331
    %2213 = vmatmul.bf16.gmra.mxu0 %v108
    %v2214 = vpop.f32.mrf.mxu0
    %v2215 = vadd.f32 %v2201, %v2214
    %v2216 = vpop.f32.mrf.mxu0
    %v2217 = vadd.f32 %v2203, %v2216
    %2218 = vdwg.mxu0
    %2219 = vmatpush.bf16.msra.mxu0 %v1421
    %2220 = vmatpush.bf16.msra.mxu0 %v1415
    %2221 = vmatpush.bf16.msra.mxu0 %v1409
    %2222 = vmatpush.bf16.msra.mxu0 %v1403
    %2223 = vmatpush.bf16.msra.mxu0 %v1397
    %2224 = vmatpush.bf16.msra.mxu0 %v1391
    %2225 = vmatpush.bf16.msra.mxu0 %v1385
    %2226 = vmatpush.bf16.msra.mxu0 %v1379
    %2227 = vmatmul.bf16.gmra.mxu0 %v109
    %v2228 = vpop.f32.mrf.mxu0
    %v2229 = vadd.f32 %v2215, %v2228
    %v2230 = vpop.f32.mrf.mxu0
    %v2231 = vadd.f32 %v2217, %v2230
    %2232 = vdwg.mxu0
    %2233 = vmatpush.bf16.msra.mxu0 %v1469
    %2234 = vmatpush.bf16.msra.mxu0 %v1463
    %2235 = vmatpush.bf16.msra.mxu0 %v1457
    %2236 = vmatpush.bf16.msra.mxu0 %v1451
    %2237 = vmatpush.bf16.msra.mxu0 %v1445
    %2238 = vmatpush.bf16.msra.mxu0 %v1439
    %2239 = vmatpush.bf16.msra.mxu0 %v1433
    %2240 = vmatpush.bf16.msra.mxu0 %v1427
    %2241 = vmatmul.bf16.gmra.mxu0 %v110
    %v2242 = vpop.f32.mrf.mxu0
    %v2243 = vadd.f32 %v2229, %v2242
    %v2244 = vpop.f32.mrf.mxu0
    %v2245 = vadd.f32 %v2231, %v2244
    %2246 = vdwg.mxu0
    %2247 = vmatpush.bf16.msra.mxu0 %v1517
    %2248 = vmatpush.bf16.msra.mxu0 %v1511
    %2249 = vmatpush.bf16.msra.mxu0 %v1505
    %2250 = vmatpush.bf16.msra.mxu0 %v1499
    %2251 = vmatpush.bf16.msra.mxu0 %v1493
    %2252 = vmatpush.bf16.msra.mxu0 %v1487
    %2253 = vmatpush.bf16.msra.mxu0 %v1481
    %2254 = vmatpush.bf16.msra.mxu0 %v1475
    %2255 = vmatmul.bf16.gmra.mxu0 %v111
    %v2256 = vpop.f32.mrf.mxu0
    %v2257 = vadd.f32 %v2243, %v2256
    %v2258 = vpop.f32.mrf.mxu0
    %v2259 = vadd.f32 %v2245, %v2258
    %2260 = vdwg.mxu0
    %2261 = vmatpush.bf16.msra.mxu0 %v1565
    %2262 = vmatpush.bf16.msra.mxu0 %v1559
    %2263 = vmatpush.bf16.msra.mxu0 %v1553
    %2264 = vmatpush.bf16.msra.mxu0 %v1547
    %2265 = vmatpush.bf16.msra.mxu0 %v1541
    %2266 = vmatpush.bf16.msra.mxu0 %v1535
    %2267 = vmatpush.bf16.msra.mxu0 %v1529
    %2268 = vmatpush.bf16.msra.mxu0 %v1523
    %2269 = vmatmul.bf16.gmra.mxu0 %v112
    %v2270 = vpop.f32.mrf.mxu0
    %v2271 = vadd.f32 %v2257, %v2270
    %v2272 = vpop.f32.mrf.mxu0
    %v2273 = vadd.f32 %v2259, %v2272
    %2274 = vdwg.mxu0
    %2275 = vmatpush.bf16.msra.mxu0 %v1326
    %2276 = vmatpush.bf16.msra.mxu0 %v1320
    %2277 = vmatpush.bf16.msra.mxu0 %v1314
    %2278 = vmatpush.bf16.msra.mxu0 %v1308
    %2279 = vmatpush.bf16.msra.mxu0 %v1302
    %2280 = vmatpush.bf16.msra.mxu0 %v1296
    %2281 = vmatpush.bf16.msra.mxu0 %v1290
    %2282 = vmatpush.bf16.msra.mxu0 %v1284
    %2283 = vmatmul.bf16.gmra.mxu0 %v107
    %v2284 = vpop.f32.mrf.mxu0
    %v2285 = vadd.f32 %v408, %v2284
    %v2286 = vpop.f32.mrf.mxu0
    %v2287 = vadd.f32 %v408, %v2286
    %2288 = vdwg.mxu0
    %2289 = vmatpush.bf16.msra.mxu0 %v1374
    %2290 = vmatpush.bf16.msra.mxu0 %v1368
    %2291 = vmatpush.bf16.msra.mxu0 %v1362
    %2292 = vmatpush.bf16.msra.mxu0 %v1356
    %2293 = vmatpush.bf16.msra.mxu0 %v1350
    %2294 = vmatpush.bf16.msra.mxu0 %v1344
    %2295 = vmatpush.bf16.msra.mxu0 %v1338
    %2296 = vmatpush.bf16.msra.mxu0 %v1332
    %2297 = vmatmul.bf16.gmra.mxu0 %v108
    %v2298 = vpop.f32.mrf.mxu0
    %v2299 = vadd.f32 %v2285, %v2298
    %v2300 = vpop.f32.mrf.mxu0
    %v2301 = vadd.f32 %v2287, %v2300
    %2302 = vdwg.mxu0
    %2303 = vmatpush.bf16.msra.mxu0 %v1422
    %2304 = vmatpush.bf16.msra.mxu0 %v1416
    %2305 = vmatpush.bf16.msra.mxu0 %v1410
    %2306 = vmatpush.bf16.msra.mxu0 %v1404
    %2307 = vmatpush.bf16.msra.mxu0 %v1398
    %2308 = vmatpush.bf16.msra.mxu0 %v1392
    %2309 = vmatpush.bf16.msra.mxu0 %v1386
    %2310 = vmatpush.bf16.msra.mxu0 %v1380
    %2311 = vmatmul.bf16.gmra.mxu0 %v109
    %v2312 = vpop.f32.mrf.mxu0
    %v2313 = vadd.f32 %v2299, %v2312
    %v2314 = vpop.f32.mrf.mxu0
    %v2315 = vadd.f32 %v2301, %v2314
    %2316 = vdwg.mxu0
    %2317 = vmatpush.bf16.msra.mxu0 %v1470
    %2318 = vmatpush.bf16.msra.mxu0 %v1464
    %2319 = vmatpush.bf16.msra.mxu0 %v1458
    %2320 = vmatpush.bf16.msra.mxu0 %v1452
    %2321 = vmatpush.bf16.msra.mxu0 %v1446
    %2322 = vmatpush.bf16.msra.mxu0 %v1440
    %2323 = vmatpush.bf16.msra.mxu0 %v1434
    %2324 = vmatpush.bf16.msra.mxu0 %v1428
    %2325 = vmatmul.bf16.gmra.mxu0 %v110
    %v2326 = vpop.f32.mrf.mxu0
    %v2327 = vadd.f32 %v2313, %v2326
    %v2328 = vpop.f32.mrf.mxu0
    %v2329 = vadd.f32 %v2315, %v2328
    %2330 = vdwg.mxu0
    %2331 = vmatpush.bf16.msra.mxu0 %v1518
    %2332 = vmatpush.bf16.msra.mxu0 %v1512
    %2333 = vmatpush.bf16.msra.mxu0 %v1506
    %2334 = vmatpush.bf16.msra.mxu0 %v1500
    %2335 = vmatpush.bf16.msra.mxu0 %v1494
    %2336 = vmatpush.bf16.msra.mxu0 %v1488
    %2337 = vmatpush.bf16.msra.mxu0 %v1482
    %2338 = vmatpush.bf16.msra.mxu0 %v1476
    %2339 = vmatmul.bf16.gmra.mxu0 %v111
    %v2340 = vpop.f32.mrf.mxu0
    %v2341 = vadd.f32 %v2327, %v2340
    %v2342 = vpop.f32.mrf.mxu0
    %v2343 = vadd.f32 %v2329, %v2342
    %2344 = vdwg.mxu0
    %2345 = vmatpush.bf16.msra.mxu0 %v1566
    %2346 = vmatpush.bf16.msra.mxu0 %v1560
    %2347 = vmatpush.bf16.msra.mxu0 %v1554
    %2348 = vmatpush.bf16.msra.mxu0 %v1548
    %2349 = vmatpush.bf16.msra.mxu0 %v1542
    %2350 = vmatpush.bf16.msra.mxu0 %v1536
    %2351 = vmatpush.bf16.msra.mxu0 %v1530
    %2352 = vmatpush.bf16.msra.mxu0 %v1524
    %2353 = vmatmul.bf16.gmra.mxu0 %v112
    %v2354 = vpop.f32.mrf.mxu0
    %v2355 = vadd.f32 %v2341, %v2354
    %v2356 = vpop.f32.mrf.mxu0
    %v2357 = vadd.f32 %v2343, %v2356
    %2358 = vdwg.mxu0
    %vm2359 = vcmp.gt.f32.partialorder %v1935, 0.0
    %vm2360 = vcmp.gt.f32.partialorder %v2019, 0.0
    %vm2361 = vcmp.gt.f32.partialorder %v2103, 0.0
    %vm2362 = vcmp.gt.f32.partialorder %v2187, 0.0
    %vm2363 = vcmp.gt.f32.partialorder %v2271, 0.0
    %vm2364 = vcmp.gt.f32.partialorder %v2355, 0.0
    %vm2365 = vcmp.gt.f32.partialorder %v1937, 0.0
    %vm2366 = vcmp.gt.f32.partialorder %v2021, 0.0
    %vm2367 = vcmp.gt.f32.partialorder %v2105, 0.0
    %vm2368 = vcmp.gt.f32.partialorder %v2189, 0.0
    %vm2369 = vcmp.gt.f32.partialorder %v2273, 0.0
    %vm2370 = vcmp.gt.f32.partialorder %v2357, 0.0
    %v2371 = vmul.f32 %v1935, 0.2
    %v2372 = vmul.f32 %v2019, 0.2
    %v2373 = vmul.f32 %v2103, 0.2
    %v2374 = vmul.f32 %v2187, 0.2
    %v2375 = vmul.f32 %v2271, 0.2
    %v2376 = vmul.f32 %v2355, 0.2
    %v2377 = vmul.f32 %v1937, 0.2
    %v2378 = vmul.f32 %v2021, 0.2
    %v2379 = vmul.f32 %v2105, 0.2
    %v2380 = vmul.f32 %v2189, 0.2
    %v2381 = vmul.f32 %v2273, 0.2
    %v2382 = vmul.f32 %v2357, 0.2
    %v2383 = vsel %vm2359, %v1935, %v2371
    %v2384 = vsel %vm2360, %v2019, %v2372
    %v2385 = vsel %vm2361, %v2103, %v2373
    %v2386 = vsel %vm2362, %v2187, %v2374
    %v2387 = vsel %vm2363, %v2271, %v2375
    %v2388 = vsel %vm2364, %v2355, %v2376
    %v2389 = vsel %vm2365, %v1937, %v2377
    %v2390 = vsel %vm2366, %v2021, %v2378
    %v2391 = vsel %vm2367, %v2105, %v2379
    %v2392 = vsel %vm2368, %v2189, %v2380
    %v2393 = vsel %vm2369, %v2273, %v2381
    %v2394 = vsel %vm2370, %v2357, %v2382
    %v2395 = vpack.c.bf16 %v2389, %v2383
    %v2396 = vpack.c.bf16 %v2390, %v2384
    %v2397 = vpack.c.bf16 %v2391, %v2385
    %v2398 = vpack.c.bf16 %v2392, %v2386
    %v2399 = vpack.c.bf16 %v2393, %v2387
    %v2400 = vpack.c.bf16 %v2394, %v2388
    %v2401 = vld [vmem:[#allocation8] sm:$0xf]
    %v2402 = vld [vmem:[#allocation8 + $0x4] sm:$0xf]
    %v2403 = vld [vmem:[#allocation8 + $0x8] sm:$0xf]
    %v2404 = vld [vmem:[#allocation8 + $0xc] sm:$0xf]
    %v2405 = vld [vmem:[#allocation8 + $0x10] sm:$0xf]
    %v2406 = vld [vmem:[#allocation8 + $0x14] sm:$0xf]
    %v2407 = vld [vmem:[#allocation8 + $0x18] sm:$0xf]
    %v2408 = vld [vmem:[#allocation8 + $0x1c] sm:$0xf]
    %v2409 = vld [vmem:[#allocation8 + $0x20] sm:$0xf]
    %v2410 = vld [vmem:[#allocation8 + $0x24] sm:$0xf]
    %v2411 = vld [vmem:[#allocation8 + $0x28] sm:$0xf]
    %v2412 = vld [vmem:[#allocation8 + $0x2c] sm:$0xf]
    %v2413 = vld [vmem:[#allocation8 + $0x30] sm:$0xf]
    %v2414 = vld [vmem:[#allocation8 + $0x34] sm:$0xf]
    %v2415 = vld [vmem:[#allocation8 + $0x38] sm:$0xf]
    %v2416 = vld [vmem:[#allocation8 + $0x3c] sm:$0xf]
    %v2417 = vld [vmem:[#allocation8 + $0x40] sm:$0xf]
    %v2418 = vld [vmem:[#allocation8 + $0x44] sm:$0xf]
    %v2419 = vld [vmem:[#allocation8 + $0x48] sm:$0xf]
    %v2420 = vld [vmem:[#allocation8 + $0x4c] sm:$0xf]
    %v2421 = vld [vmem:[#allocation8 + $0x50] sm:$0xf]
    %v2422 = vld [vmem:[#allocation8 + $0x54] sm:$0xf]
    %v2423 = vld [vmem:[#allocation8 + $0x58] sm:$0xf]
    %v2424 = vld [vmem:[#allocation8 + $0x5c] sm:$0xf]
    %v2425 = vld [vmem:[#allocation8 + $0x60] sm:$0xf]
    %v2426 = vld [vmem:[#allocation8 + $0x64] sm:$0xf]
    %v2427 = vld [vmem:[#allocation8 + $0x68] sm:$0xf]
    %v2428 = vld [vmem:[#allocation8 + $0x6c] sm:$0xf]
    %v2429 = vld [vmem:[#allocation8 + $0x70] sm:$0xf]
    %v2430 = vld [vmem:[#allocation8 + $0x74] sm:$0xf]
    %v2431 = vld [vmem:[#allocation8 + $0x78] sm:$0xf]
    %v2432 = vld [vmem:[#allocation8 + $0x7c] sm:$0xf]
    %v2433 = vld [vmem:[#allocation8 + $0x80] sm:$0xf]
    %v2434 = vld [vmem:[#allocation8 + $0x84] sm:$0xf]
    %v2435 = vld [vmem:[#allocation8 + $0x88] sm:$0xf]
    %v2436 = vld [vmem:[#allocation8 + $0x8c] sm:$0xf]
    %v2437 = vld [vmem:[#allocation8 + $0x90] sm:$0xf]
    %v2438 = vld [vmem:[#allocation8 + $0x94] sm:$0xf]
    %v2439 = vld [vmem:[#allocation8 + $0x98] sm:$0xf]
    %v2440 = vld [vmem:[#allocation8 + $0x9c] sm:$0xf]
    %v2441 = vld [vmem:[#allocation8 + $0xa0] sm:$0xf]
    %v2442 = vld [vmem:[#allocation8 + $0xa4] sm:$0xf]
    %v2443 = vld [vmem:[#allocation8 + $0xa8] sm:$0xf]
    %v2444 = vld [vmem:[#allocation8 + $0xac] sm:$0xf]
    %v2445 = vld [vmem:[#allocation8 + $0xb0] sm:$0xf]
    %v2446 = vld [vmem:[#allocation8 + $0xb4] sm:$0xf]
    %v2447 = vld [vmem:[#allocation8 + $0xb8] sm:$0xf]
    %v2448 = vld [vmem:[#allocation8 + $0xbc] sm:$0xf]
    %v2449 = vld [vmem:[#allocation8 + $0xc0] sm:$0xf]
    %v2450 = vld [vmem:[#allocation8 + $0xc4] sm:$0xf]
    %v2451 = vld [vmem:[#allocation8 + $0xc8] sm:$0xf]
    %v2452 = vld [vmem:[#allocation8 + $0xcc] sm:$0xf]
    %v2453 = vld [vmem:[#allocation8 + $0xd0] sm:$0xf]
    %v2454 = vld [vmem:[#allocation8 + $0xd4] sm:$0xf]
    %v2455 = vld [vmem:[#allocation8 + $0xd8] sm:$0xf]
    %v2456 = vld [vmem:[#allocation8 + $0xdc] sm:$0xf]
    %v2457 = vld [vmem:[#allocation8 + $0xe0] sm:$0xf]
    %v2458 = vld [vmem:[#allocation8 + $0xe4] sm:$0xf]
    %v2459 = vld [vmem:[#allocation8 + $0xe8] sm:$0xf]
    %v2460 = vld [vmem:[#allocation8 + $0xec] sm:$0xf]
    %v2461 = vld [vmem:[#allocation8 + $0xf0] sm:$0xf]
    %v2462 = vld [vmem:[#allocation8 + $0xf4] sm:$0xf]
    %v2463 = vld [vmem:[#allocation8 + $0xf8] sm:$0xf]
    %v2464 = vld [vmem:[#allocation8 + $0xfc] sm:$0xf]
    %v2465 = vld [vmem:[#allocation8 + $0x100] sm:$0xf]
    %v2466 = vld [vmem:[#allocation8 + $0x104] sm:$0xf]
    %v2467 = vld [vmem:[#allocation8 + $0x108] sm:$0xf]
    %v2468 = vld [vmem:[#allocation8 + $0x10c] sm:$0xf]
    %v2469 = vld [vmem:[#allocation8 + $0x110] sm:$0xf]
    %v2470 = vld [vmem:[#allocation8 + $0x114] sm:$0xf]
    %v2471 = vld [vmem:[#allocation8 + $0x118] sm:$0xf]
    %v2472 = vld [vmem:[#allocation8 + $0x11c] sm:$0xf]
    %v2473 = vld [vmem:[#allocation8 + $0x120] sm:$0xf]
    %v2474 = vld [vmem:[#allocation8 + $0x124] sm:$0xf]
    %v2475 = vld [vmem:[#allocation8 + $0x128] sm:$0xf]
    %v2476 = vld [vmem:[#allocation8 + $0x12c] sm:$0xf]
    %v2477 = vld [vmem:[#allocation8 + $0x130] sm:$0xf]
    %v2478 = vld [vmem:[#allocation8 + $0x134] sm:$0xf]
    %v2479 = vld [vmem:[#allocation8 + $0x138] sm:$0xf]
    %v2480 = vld [vmem:[#allocation8 + $0x13c] sm:$0xf]
    %v2481 = vld [vmem:[#allocation8 + $0x140] sm:$0xf]
    %v2482 = vld [vmem:[#allocation8 + $0x144] sm:$0xf]
    %v2483 = vld [vmem:[#allocation8 + $0x148] sm:$0xf]
    %v2484 = vld [vmem:[#allocation8 + $0x14c] sm:$0xf]
    %v2485 = vld [vmem:[#allocation8 + $0x150] sm:$0xf]
    %v2486 = vld [vmem:[#allocation8 + $0x154] sm:$0xf]
    %v2487 = vld [vmem:[#allocation8 + $0x158] sm:$0xf]
    %v2488 = vld [vmem:[#allocation8 + $0x15c] sm:$0xf]
    %v2489 = vld [vmem:[#allocation8 + $0x160] sm:$0xf]
    %v2490 = vld [vmem:[#allocation8 + $0x164] sm:$0xf]
    %v2491 = vld [vmem:[#allocation8 + $0x168] sm:$0xf]
    %v2492 = vld [vmem:[#allocation8 + $0x16c] sm:$0xf]
    %v2493 = vld [vmem:[#allocation8 + $0x170] sm:$0xf]
    %v2494 = vld [vmem:[#allocation8 + $0x174] sm:$0xf]
    %v2495 = vld [vmem:[#allocation8 + $0x178] sm:$0xf]
    %v2496 = vld [vmem:[#allocation8 + $0x17c] sm:$0xf]
    %v2497 = vld [vmem:[#allocation10] sm:$0x1]
    %v2499 = vperm.slane %v2497, 0
    %v2597 = vunpack.c.l.b16 %v2401
    %v2598 = vunpack.c.l.b16 %v2402
    %v2599 = vunpack.c.l.b16 %v2403
    %v2600 = vunpack.c.l.b16 %v2404
    %v2601 = vunpack.c.l.b16 %v2405
    %v2602 = vunpack.c.l.b16 %v2406
    %v2603 = vunpack.c.l.b16 %v2407
    %v2604 = vunpack.c.l.b16 %v2408
    %v2605 = vunpack.c.l.b16 %v2409
    %v2606 = vunpack.c.l.b16 %v2410
    %v2607 = vunpack.c.l.b16 %v2411
    %v2608 = vunpack.c.l.b16 %v2412
    %v2609 = vunpack.c.l.b16 %v2413
    %v2610 = vunpack.c.l.b16 %v2414
    %v2611 = vunpack.c.l.b16 %v2415
    %v2612 = vunpack.c.l.b16 %v2416
    %v2613 = vunpack.c.l.b16 %v2417
    %v2614 = vunpack.c.l.b16 %v2418
    %v2615 = vunpack.c.l.b16 %v2419
    %v2616 = vunpack.c.l.b16 %v2420
    %v2617 = vunpack.c.l.b16 %v2421
    %v2618 = vunpack.c.l.b16 %v2422
    %v2619 = vunpack.c.l.b16 %v2423
    %v2620 = vunpack.c.l.b16 %v2424
    %v2621 = vunpack.c.l.b16 %v2425
    %v2622 = vunpack.c.l.b16 %v2426
    %v2623 = vunpack.c.l.b16 %v2427
    %v2624 = vunpack.c.l.b16 %v2428
    %v2625 = vunpack.c.l.b16 %v2429
    %v2626 = vunpack.c.l.b16 %v2430
    %v2627 = vunpack.c.l.b16 %v2431
    %v2628 = vunpack.c.l.b16 %v2432
    %v2629 = vunpack.c.l.b16 %v2433
    %v2630 = vunpack.c.l.b16 %v2434
    %v2631 = vunpack.c.l.b16 %v2435
    %v2632 = vunpack.c.l.b16 %v2436
    %v2633 = vunpack.c.l.b16 %v2437
    %v2634 = vunpack.c.l.b16 %v2438
    %v2635 = vunpack.c.l.b16 %v2439
    %v2636 = vunpack.c.l.b16 %v2440
    %v2637 = vunpack.c.l.b16 %v2441
    %v2638 = vunpack.c.l.b16 %v2442
    %v2639 = vunpack.c.l.b16 %v2443
    %v2640 = vunpack.c.l.b16 %v2444
    %v2641 = vunpack.c.l.b16 %v2445
    %v2642 = vunpack.c.l.b16 %v2446
    %v2643 = vunpack.c.l.b16 %v2447
    %v2644 = vunpack.c.l.b16 %v2448
    %v2645 = vunpack.c.l.b16 %v2449
    %v2646 = vunpack.c.l.b16 %v2450
    %v2647 = vunpack.c.l.b16 %v2451
    %v2648 = vunpack.c.l.b16 %v2452
    %v2649 = vunpack.c.l.b16 %v2453
    %v2650 = vunpack.c.l.b16 %v2454
    %v2651 = vunpack.c.l.b16 %v2455
    %v2652 = vunpack.c.l.b16 %v2456
    %v2653 = vunpack.c.l.b16 %v2457
    %v2654 = vunpack.c.l.b16 %v2458
    %v2655 = vunpack.c.l.b16 %v2459
    %v2656 = vunpack.c.l.b16 %v2460
    %v2657 = vunpack.c.l.b16 %v2461
    %v2658 = vunpack.c.l.b16 %v2462
    %v2659 = vunpack.c.l.b16 %v2463
    %v2660 = vunpack.c.l.b16 %v2464
    %v2661 = vunpack.c.l.b16 %v2465
    %v2662 = vunpack.c.l.b16 %v2466
    %v2663 = vunpack.c.l.b16 %v2467
    %v2664 = vunpack.c.l.b16 %v2468
    %v2665 = vunpack.c.l.b16 %v2469
    %v2666 = vunpack.c.l.b16 %v2470
    %v2667 = vunpack.c.l.b16 %v2471
    %v2668 = vunpack.c.l.b16 %v2472
    %v2669 = vunpack.c.l.b16 %v2473
    %v2670 = vunpack.c.l.b16 %v2474
    %v2671 = vunpack.c.l.b16 %v2475
    %v2672 = vunpack.c.l.b16 %v2476
    %v2673 = vunpack.c.l.b16 %v2477
    %v2674 = vunpack.c.l.b16 %v2478
    %v2675 = vunpack.c.l.b16 %v2479
    %v2676 = vunpack.c.l.b16 %v2480
    %v2677 = vunpack.c.l.b16 %v2481
    %v2678 = vunpack.c.l.b16 %v2482
    %v2679 = vunpack.c.l.b16 %v2483
    %v2680 = vunpack.c.l.b16 %v2484
    %v2681 = vunpack.c.l.b16 %v2485
    %v2682 = vunpack.c.l.b16 %v2486
    %v2683 = vunpack.c.l.b16 %v2487
    %v2684 = vunpack.c.l.b16 %v2488
    %v2685 = vunpack.c.l.b16 %v2489
    %v2686 = vunpack.c.l.b16 %v2490
    %v2687 = vunpack.c.l.b16 %v2491
    %v2688 = vunpack.c.l.b16 %v2492
    %v2689 = vunpack.c.l.b16 %v2493
    %v2690 = vunpack.c.l.b16 %v2494
    %v2691 = vunpack.c.l.b16 %v2495
    %v2692 = vunpack.c.l.b16 %v2496
    %v2693 = vpack.c.b16 %v2598, %v2597
    %v2694 = vpack.c.b16 %v2600, %v2599
    %v2695 = vpack.c.b16 %v2602, %v2601
    %v2696 = vpack.c.b16 %v2604, %v2603
    %v2697 = vpack.c.b16 %v2606, %v2605
    %v2698 = vpack.c.b16 %v2608, %v2607
    %v2699 = vpack.c.b16 %v2610, %v2609
    %v2700 = vpack.c.b16 %v2612, %v2611
    %v2701 = vpack.c.b16 %v2614, %v2613
    %v2702 = vpack.c.b16 %v2616, %v2615
    %v2703 = vpack.c.b16 %v2618, %v2617
    %v2704 = vpack.c.b16 %v2620, %v2619
    %v2705 = vpack.c.b16 %v2622, %v2621
    %v2706 = vpack.c.b16 %v2624, %v2623
    %v2707 = vpack.c.b16 %v2626, %v2625
    %v2708 = vpack.c.b16 %v2628, %v2627
    %v2709 = vpack.c.b16 %v2630, %v2629
    %v2710 = vpack.c.b16 %v2632, %v2631
    %v2711 = vpack.c.b16 %v2634, %v2633
    %v2712 = vpack.c.b16 %v2636, %v2635
    %v2713 = vpack.c.b16 %v2638, %v2637
    %v2714 = vpack.c.b16 %v2640, %v2639
    %v2715 = vpack.c.b16 %v2642, %v2641
    %v2716 = vpack.c.b16 %v2644, %v2643
    %v2717 = vpack.c.b16 %v2646, %v2645
    %v2718 = vpack.c.b16 %v2648, %v2647
    %v2719 = vpack.c.b16 %v2650, %v2649
    %v2720 = vpack.c.b16 %v2652, %v2651
    %v2721 = vpack.c.b16 %v2654, %v2653
    %v2722 = vpack.c.b16 %v2656, %v2655
    %v2723 = vpack.c.b16 %v2658, %v2657
    %v2724 = vpack.c.b16 %v2660, %v2659
    %v2725 = vpack.c.b16 %v2662, %v2661
    %v2726 = vpack.c.b16 %v2664, %v2663
    %v2727 = vpack.c.b16 %v2666, %v2665
    %v2728 = vpack.c.b16 %v2668, %v2667
    %v2729 = vpack.c.b16 %v2670, %v2669
    %v2730 = vpack.c.b16 %v2672, %v2671
    %v2731 = vpack.c.b16 %v2674, %v2673
    %v2732 = vpack.c.b16 %v2676, %v2675
    %v2733 = vpack.c.b16 %v2678, %v2677
    %v2734 = vpack.c.b16 %v2680, %v2679
    %v2735 = vpack.c.b16 %v2682, %v2681
    %v2736 = vpack.c.b16 %v2684, %v2683
    %v2737 = vpack.c.b16 %v2686, %v2685
    %v2738 = vpack.c.b16 %v2688, %v2687
    %v2739 = vpack.c.b16 %v2690, %v2689
    %v2740 = vpack.c.b16 %v2692, %v2691
    %2789 = vmatpush.bf16.msra.mxu0 %v2700
    %2790 = vmatpush.bf16.msra.mxu0 %v2699
    %2791 = vmatpush.bf16.msra.mxu0 %v2698
    %2792 = vmatpush.bf16.msra.mxu0 %v2697
    %2793 = vmatpush.bf16.msra.mxu0 %v2696
    %2794 = vmatpush.bf16.msra.mxu0 %v2695
    %2795 = vmatpush.bf16.msra.mxu0 %v2694
    %2796 = vmatpush.bf16.msra.mxu0 %v2693
    %2797 = vmatmul.bf16.gmra.mxu0 %v2395
    %v2798 = vpop.f32.mrf.mxu0
    %v2799 = vadd.f32 %v2499, %v2798
    %v2800 = vpop.f32.mrf.mxu0
    %v2801 = vadd.f32 %v2499, %v2800
    %2802 = vdwg.mxu0
    %2803 = vmatpush.bf16.msra.mxu0 %v2708
    %2804 = vmatpush.bf16.msra.mxu0 %v2707
    %2805 = vmatpush.bf16.msra.mxu0 %v2706
    %2806 = vmatpush.bf16.msra.mxu0 %v2705
    %2807 = vmatpush.bf16.msra.mxu0 %v2704
    %2808 = vmatpush.bf16.msra.mxu0 %v2703
    %2809 = vmatpush.bf16.msra.mxu0 %v2702
    %2810 = vmatpush.bf16.msra.mxu0 %v2701
    %2811 = vmatmul.bf16.gmra.mxu0 %v2396
    %v2812 = vpop.f32.mrf.mxu0
    %v2813 = vadd.f32 %v2799, %v2812
    %v2814 = vpop.f32.mrf.mxu0
    %v2815 = vadd.f32 %v2801, %v2814
    %2816 = vdwg.mxu0
    %2817 = vmatpush.bf16.msra.mxu0 %v2716
    %2818 = vmatpush.bf16.msra.mxu0 %v2715
    %2819 = vmatpush.bf16.msra.mxu0 %v2714
    %2820 = vmatpush.bf16.msra.mxu0 %v2713
    %2821 = vmatpush.bf16.msra.mxu0 %v2712
    %2822 = vmatpush.bf16.msra.mxu0 %v2711
    %2823 = vmatpush.bf16.msra.mxu0 %v2710
    %2824 = vmatpush.bf16.msra.mxu0 %v2709
    %2825 = vmatmul.bf16.gmra.mxu0 %v2397
    %v2826 = vpop.f32.mrf.mxu0
    %v2827 = vadd.f32 %v2813, %v2826
    %v2828 = vpop.f32.mrf.mxu0
    %v2829 = vadd.f32 %v2815, %v2828
    %2830 = vdwg.mxu0
    %2831 = vmatpush.bf16.msra.mxu0 %v2724
    %2832 = vmatpush.bf16.msra.mxu0 %v2723
    %2833 = vmatpush.bf16.msra.mxu0 %v2722
    %2834 = vmatpush.bf16.msra.mxu0 %v2721
    %2835 = vmatpush.bf16.msra.mxu0 %v2720
    %2836 = vmatpush.bf16.msra.mxu0 %v2719
    %2837 = vmatpush.bf16.msra.mxu0 %v2718
    %2838 = vmatpush.bf16.msra.mxu0 %v2717
    %2839 = vmatmul.bf16.gmra.mxu0 %v2398
    %v2840 = vpop.f32.mrf.mxu0
    %v2841 = vadd.f32 %v2827, %v2840
    %v2842 = vpop.f32.mrf.mxu0
    %v2843 = vadd.f32 %v2829, %v2842
    %2844 = vdwg.mxu0
    %2845 = vmatpush.bf16.msra.mxu0 %v2732
    %2846 = vmatpush.bf16.msra.mxu0 %v2731
    %2847 = vmatpush.bf16.msra.mxu0 %v2730
    %2848 = vmatpush.bf16.msra.mxu0 %v2729
    %2849 = vmatpush.bf16.msra.mxu0 %v2728
    %2850 = vmatpush.bf16.msra.mxu0 %v2727
    %2851 = vmatpush.bf16.msra.mxu0 %v2726
    %2852 = vmatpush.bf16.msra.mxu0 %v2725
    %2853 = vmatmul.bf16.gmra.mxu0 %v2399
    %v2854 = vpop.f32.mrf.mxu0
    %v2855 = vadd.f32 %v2841, %v2854
    %v2856 = vpop.f32.mrf.mxu0
    %v2857 = vadd.f32 %v2843, %v2856
    %2858 = vdwg.mxu0
    %2859 = vmatpush.bf16.msra.mxu0 %v2740
    %2860 = vmatpush.bf16.msra.mxu0 %v2739
    %2861 = vmatpush.bf16.msra.mxu0 %v2738
    %2862 = vmatpush.bf16.msra.mxu0 %v2737
    %2863 = vmatpush.bf16.msra.mxu0 %v2736
    %2864 = vmatpush.bf16.msra.mxu0 %v2735
    %2865 = vmatpush.bf16.msra.mxu0 %v2734
    %2866 = vmatpush.bf16.msra.mxu0 %v2733
    %2867 = vmatmul.bf16.gmra.mxu0 %v2400
    %v2868 = vpop.f32.mrf.mxu0
    %v2869 = vadd.f32 %v2855, %v2868
    %v2870 = vpop.f32.mrf.mxu0
    %v2871 = vadd.f32 %v2857, %v2870
    %2872 = vdwg.mxu0
    %2873 = vst [vmem:[#allocation11] sm:$0xff] %v2869
    %2874 = vst [vmem:[#allocation11 + $0x8] sm:$0xff] %v2871
    // Predicated region
    $region42: #{tpu_custom_call.1} parent=1 // pred_check
      _
    $region43: #{tpu_custom_call.1} parent=1 // pred_check_branch
      %2876 = sbr.rel (0) target = $region45
    $region44: #{tpu_custom_call.1} parent=1 // pred_region
      %2878 = vsyncadd [#allocation4], 0
      %s2879 = sshll.u32 [#allocation11], 4
      %s2880 = int_to_ptr.vmem [resolvable:$true] %s2879
      %s2881 = sshll.u32 %s5, 4
      %s2882 = int_to_ptr.hbm [resolvable:$true] %s2881
      %2887 = dma.vmem_to_hbm [thread:$0]  %s2880, 256, %s2882, [#allocation4], 128, 128, 8
    $region45: #{tpu_custom_call.1} parent=1 // pred_fallthru
      _
    // Predicated region
    $region46: #{tpu_custom_call.1} parent=1 // pred_check
      _
    $region47: #{tpu_custom_call.1} parent=1 // pred_check_branch
      %2889 = sbr.rel (0) target = $region49
    $region48: #{tpu_custom_call.1} parent=1 // pred_region
      %2891 = dma.done [#allocation4], 256
    $region49: #{tpu_custom_call.1} parent=1 // pred_fallthru
      _
    %2892 = vsyncpa [#allocation3], 1
    %2893 = vsyncpa [#allocation6], 1
    %2894 = vsyncpa [#allocation9], 1
    %2895 = vsyncpa [#allocation4], 1

</llo_original>
